<compile_context>
chip_gen: v6e
topology: v6e:2x2x1
jax: 0.10.0
libtpu: 0.0.40
codegen_flags: <defaults>
</compile_context>

<pallas_src>
import jax
import jax.numpy as jnp
import numpy as np
from jax.experimental import pallas as pl
from jax.experimental.pallas import tpu as pltpu

# ---- config (SinkhornNet defaults scaled to small test shapes) -------------
PATCH_DIM = 4
D_IN = 2 * PATCH_DIM * PATCH_DIM * 2      # 64  (== 2*patch_dim*patch_dim*2)
LATENT_DIM = 16
K = 8                                     # n (permutation size)
N_SAMPLES = 3
NOISE_FACTOR = 1.0
TEMP = 1.0
N_ITERS = 20
B = 2
C = K          # channel dim must equal K so log_alpha.view(-1, n, n) is square

PACK_W = 128                              # one full f32 vreg of lanes
N_GROUPS = PACK_W // K                    # 16 lane-groups of width K
N_REAL_GROUPS = N_SAMPLES * B             # 6 real (sample, batch) groups

assert C == K, "SinkhornNet requires channels == K (log_alpha.view(-1, n, n))"
assert (K & (K - 1)) == 0 and K <= PACK_W, "lane-group butterfly needs K a power of two"
assert N_REAL_GROUPS <= N_GROUPS
assert B * D_IN <= PACK_W and B * LATENT_DIM <= PACK_W


def _lse(x, axis):
    """Numerically stable logsumexp with keepdims (same as torch.logsumexp)."""
    m = jnp.max(x, axis=axis, keepdims=True)
    return m + jnp.log(jnp.sum(jnp.exp(x - m), axis=axis, keepdims=True))


# --------------------------- fused kernel -----------------------------------
def sinkhorn_net_kernel(x_ref, w1_ref, w2_ref, bias_ref, noise_ref,
                        lat_ref, p_ref):
    f32 = jnp.float32

    # --- encoder: two tiny MXU matmuls, output directly in packed layout ----
    # x_ref:  (K, B*D_IN)             x_packed[r, b*D_IN + d]  = x[b, r, d]
    # w1_ref: (B*D_IN, B*LATENT_DIM)  block-diag(w1, ..., w1)
    # w2_ref: (B*LATENT_DIM, PACK_W)  w2 replicated into every lane group g (b = g % B)
    # bias_ref: (8, PACK_W) merged bias slab: row 0 = b1 (tiled over B),
    #                                         row 1 = b2 (tiled over groups)
    b1v = bias_ref[0:1, 0:B * LATENT_DIM]                            # (1, 32)
    b2v = bias_ref[1:2, :]                                           # (1, 128)
    h = jnp.dot(x_ref[...], w1_ref[...], preferred_element_type=f32) + b1v
    h = jnp.maximum(h, 0.0)                                          # ReLU
    latent_rep = jnp.dot(h, w2_ref[...], preferred_element_type=f32) + b2v
    # latent_rep[r, g*K + c] == latent[b = g % B, r, c] for every lane group g
    lat_ref[...] = latent_rep          # lane-dense store; wrapper slices B*K real lanes

    # --- LSE over matrix rows (channels == sublanes) -------------------------
    def sublane_lse_max(x):            # full LSE (arbitrary inputs)
        m = jnp.max(x, axis=0, keepdims=True)
        return m + jnp.log(jnp.sum(jnp.exp(x - m), axis=0, keepdims=True))

    def sublane_lse(x):                # max-free LSE; valid because x <= 0 here
        return jnp.log(jnp.sum(jnp.exp(x), axis=0, keepdims=True))

    # --- LogSoftmax(dim=1): softmax over channels (raw logits -> keep max) ---
    log_alpha = latent_rep - sublane_lse_max(latent_rep)

    # --- repeat over samples (already replicated per lane group) + gumbel ----
    la = log_alpha + noise_ref[...]
    if TEMP != 1.0:                    # fold 1/temp into a multiply; skip when temp == 1
        la = la * f32(1.0 / TEMP)

    # --- constants for the segmented (per K-lane group) butterfly reduce -----
    # Built with a roll of the lane index itself so correctness does not depend
    # on the roll direction convention.  One-time prologue, hoisted out of the
    # hot loop (constants kept in-kernel to avoid extra constant-input DMAs).
    lanes = jax.lax.broadcasted_iota(jnp.int32, (K, PACK_W), 1)
    lanes_f = lanes.astype(f32)
    in_grp = lanes % K
    dists = [K >> (i + 1) for i in range(K.bit_length() - 1)]         # [4, 2, 1]
    sels = []
    for d in dists:
        partner = jnp.where((in_grp % (2 * d)) < d, lanes_f + d, lanes_f - d)
        sels.append(pltpu.roll(lanes_f, d, axis=1) == partner)

    def group_partner(x, d, sel):      # value of the in-group partner lane
        return jnp.where(sel, pltpu.roll(x, d, axis=1),
                         pltpu.roll(x, PACK_W - d, axis=1))

    def group_sum(s):                  # sum within each K-lane group, broadcast back
        for d, sel in zip(dists, sels):
            s = s + group_partner(s, d, sel)
        return s

    def group_lse(x):                  # max-free LSE per lane group; valid when x <= 0
        return jnp.log(group_sum(jnp.exp(x)))

    def group_lse_max(x):              # full LSE per lane group (first iteration only)
        m = x
        for d, sel in zip(dists, sels):
            m = jnp.maximum(m, group_partner(m, d, sel))
        return m + jnp.log(group_sum(jnp.exp(x - m)))

    # --- Sinkhorn normalisation: peel iteration 1, then max-free iterations --
    la = la - group_lse_max(la)        # row normalisation (entries may exceed 0 here)
    la = la - sublane_lse(la)          # column normalisation (entries now <= 0)
    for _ in range(N_ITERS - 1):
        la = la - group_lse(la)        # row normalisation   (logsumexp over cols)
        la = la - sublane_lse(la)      # column normalisation (logsumexp over rows)

    p_ref[...] = jnp.exp(la)           # lane-dense (K, 128) store


# --------------------------- wrapper -----------------------------------------
def pack_params(params):
    """One-time, host-side repack of the encoder weights into the kernel's
    packed (K, PACK_W) Sinkhorn lane layout.  Hoisted out of the jitted path
    so no kron/tile XLA ops run per forward call."""
    w1, b1, w2, b2 = (np.asarray(p, dtype=np.float32) for p in params)
    w1_blk = np.kron(np.eye(B, dtype=np.float32), w1)           # (B*D_IN, B*LATENT_DIM)
    grp = (np.arange(N_GROUPS)[None, :] % B) == np.arange(B)[:, None]
    w2_rep = np.kron(grp.astype(np.float32), w2)                # (B*LATENT_DIM, PACK_W)
    bias = np.zeros((8, PACK_W), dtype=np.float32)              # merged bias slab
    bias[0, : B * LATENT_DIM] = np.tile(b1.reshape(-1), B)
    bias[1, :] = np.tile(b2.reshape(-1), N_GROUPS)
    return jnp.asarray(w1_blk), jnp.asarray(w2_rep), jnp.asarray(bias)


@jax.jit
def sinkhorn_net_forward(im, z, packed_params, noise):
    del z  # unused in the PyTorch forward
    w1_blk, w2_rep, bias = packed_params
    bm, cm = im.shape[0], im.shape[1]
    # log_alpha.view(-1, n, n) in PyTorch silently requires channels == K.
    assert bm == B and cm == C and cm == K, "channel dim must equal K"

    x = im.reshape(bm, cm, -1).astype(jnp.float32)               # Flatten: (B, C, D_IN)
    assert x.shape[-1] == D_IN

    # layout plumbing only: pack inputs into the kernel's lane layout
    x_packed = jnp.transpose(x, (1, 0, 2)).reshape(cm, bm * D_IN)        # (K, B*D_IN)
    n_real_lanes = N_SAMPLES * bm * K
    noise_packed = jnp.transpose(noise, (2, 0, 1, 3)).reshape(K, n_real_lanes)
    noise_packed = jnp.pad(noise_packed, ((0, 0), (0, PACK_W - n_real_lanes)))

    # NOTE: at production sizes first fill all 16 lane groups (free, the loop
    # cost is independent of how many lanes are real), then add a leading
    # "parallel" grid axis over (sample, batch) groups so v7x megacore can
    # split work; at these toy shapes a single un-gridded call is fastest.
    lat_packed, p_packed = pl.pallas_call(
        sinkhorn_net_kernel,
        out_shape=(
            jax.ShapeDtypeStruct((K, PACK_W), jnp.float32),   # latent (packed, replicated)
            jax.ShapeDtypeStruct((K, PACK_W), jnp.float32),   # sinkhorn result (packed)
        ),
        in_specs=[pl.BlockSpec(memory_space=pltpu.MemorySpace.VMEM)] * 5,
        out_specs=(pl.BlockSpec(memory_space=pltpu.MemorySpace.VMEM),
                   pl.BlockSpec(memory_space=pltpu.MemorySpace.VMEM)),
    )(x_packed, w1_blk, w2_rep, bias, noise_packed)

    # unpack (wrapper-side layout plumbing)
    latent = lat_packed[:, : bm * K].reshape(K, bm, K).transpose(1, 0, 2)   # (B, C, K)
    p = (p_packed[:, : n_real_lanes]
         .reshape(K, N_SAMPLES, bm, K)
         .transpose(1, 2, 0, 3))                                            # (S, B, n, n)
    # torch returns (transpose(P, 2, 3), latent); the transposes in
    # inv_soft_pers_flattened + the final transpose cancel back to sink.view.
    return p, latent


# --------------------------- pure-JAX reference -------------------------------
def reference_forward(im, params, noise):
    w1, b1, w2, b2 = params
    x = im.reshape(im.shape[0], im.shape[1], -1).astype(jnp.float32)
    h = jnp.maximum(
        jnp.einsum("bcd,dl->bcl", x, w1, precision=jax.lax.Precision.HIGHEST) + b1[0],
        0.0,
    )
    latent = (
        jnp.einsum("bcl,lk->bck", h, w2, precision=jax.lax.Precision.HIGHEST) + b2[0]
    )
    log_alpha = latent - _lse(latent, axis=1)
    la = (log_alpha.reshape(B, K, K)[None] + noise) / TEMP
    for _ in range(N_ITERS):
        la = la - _lse(la, axis=-1)
        la = la - _lse(la, axis=-2)
    return jnp.exp(la), latent


if __name__ == "__main__":
    key = jax.random.PRNGKey(0)
    kim, kz, kw1, kb1, kw2, kb2, knoise = jax.random.split(key, 7)

    # Inputs: im flattens per channel to 2*patch_dim*patch_dim*2 = 64 features.
    im = jax.random.normal(kim, (B, C, 2, PATCH_DIM, 2 * PATCH_DIM), dtype=jnp.float32)
    z = jax.random.normal(kz, (B, K, 2), dtype=jnp.float32)   # unused by forward

    # Deterministic parameter init (PyTorch-Linear-style uniform bounds).
    lim1 = 1.0 / np.sqrt(D_IN)
    w1 = jax.random.uniform(kw1, (D_IN, LATENT_DIM), jnp.float32, -lim1, lim1)
    b1 = jax.random.uniform(kb1, (1, LATENT_DIM), jnp.float32, -lim1, lim1)
    lim2 = 1.0 / np.sqrt(LATENT_DIM)
    w2 = jax.random.uniform(kw2, (LATENT_DIM, K), jnp.float32, -lim2, lim2)
    b2 = jax.random.uniform(kb2, (1, K), jnp.float32, -lim2, lim2)
    params = (w1, b1, w2, b2)

    # Gumbel noise, matching sample_gumbel: -log(eps - log(U + eps)).
    eps = 1e-20
    u = jax.random.uniform(knoise, (N_SAMPLES, B, K, K), dtype=jnp.float32)
    noise = -jnp.log(eps - jnp.log(u + eps)) * NOISE_FACTOR

    # One-time weight repack (cached; only redo when parameters change).
    packed_params = jax.block_until_ready(pack_params(params))

    p_out, latent_out = sinkhorn_net_forward(im, z, packed_params, noise)
    jax.block_until_ready((p_out, latent_out))

    p_ref, latent_ref = reference_forward(im, params, noise)
    assert p_out.shape == (N_SAMPLES, B, K, K)
    assert latent_out.shape == (B, C, K)
    # The only deviation source vs. the HIGHEST-precision reference is the
    # MXU's default f32 matmul precision for the two tiny encoder dots; the
    # Sinkhorn stage itself matches to ~1e-5 (max-free LSE only changes
    # rounding, not stability, since all normalised entries are <= 0).
    np.testing.assert_allclose(np.asarray(latent_out), np.asarray(latent_ref),
                               atol=1e-2, rtol=1e-2)
    np.testing.assert_allclose(np.asarray(p_out), np.asarray(p_ref),
                               atol=1e-2, rtol=1e-2)
    print("KERNEL_OK")
</pallas_src>

<mosaic_0001>
module attributes {stable_mosaic.version = 11 : i64} {
  func.func @sinkhorn_net_kernel(%arg0: memref<8x128xf32, #tpu.memory_space<vmem>>, %arg1: memref<128x32xf32, #tpu.memory_space<vmem>>, %arg2: memref<32x128xf32, #tpu.memory_space<vmem>>, %arg3: memref<8x128xf32, #tpu.memory_space<vmem>>, %arg4: memref<8x128xf32, #tpu.memory_space<vmem>>, %arg5: memref<8x128xf32, #tpu.memory_space<vmem>>, %arg6: memref<8x128xf32, #tpu.memory_space<vmem>>) attributes {dimension_semantics = [], scalar_prefetch = 0 : i64, scratch_operands = 0 : i64, tpu.core_type = #tpu.core_type<tc>} {
    %c0 = arith.constant 0 : index
    %c0_0 = arith.constant 0 : index
    %0 = vector.load %arg3[%c0, %c0_0] : memref<8x128xf32, #tpu.memory_space<vmem>>, vector<1x32xf32>
    %c1 = arith.constant 1 : index
    %c0_1 = arith.constant 0 : index
    %1 = vector.load %arg3[%c1, %c0_1] : memref<8x128xf32, #tpu.memory_space<vmem>>, vector<1x128xf32>
    %c0_2 = arith.constant 0 : index
    %c0_3 = arith.constant 0 : index
    %2 = vector.load %arg0[%c0_2, %c0_3] : memref<8x128xf32, #tpu.memory_space<vmem>>, vector<8x128xf32>
    %c0_4 = arith.constant 0 : index
    %c0_5 = arith.constant 0 : index
    %3 = vector.load %arg1[%c0_4, %c0_5] : memref<128x32xf32, #tpu.memory_space<vmem>>, vector<128x32xf32>
    %cst = arith.constant dense<0.000000e+00> : vector<8x32xf32>
    %4 = tpu.matmul %2, %3, %cst {dimension_numbers = #tpu.dot_dimension_numbers<[1], [0], [0], [1], [0, 0, 1, 1], [], []>} : vector<8x128xf32>, vector<128x32xf32>, vector<8x32xf32> -> vector<8x32xf32>
    %5 = vector.broadcast %0 : vector<1x32xf32> to vector<8x32xf32>
    %6 = arith.addf %4, %5 : vector<8x32xf32>
    %cst_6 = arith.constant 0.000000e+00 : f32
    %7 = vector.broadcast %cst_6 : f32 to vector<8x32xf32>
    %8 = arith.maximumf %6, %7 : vector<8x32xf32>
    %c0_7 = arith.constant 0 : index
    %c0_8 = arith.constant 0 : index
    %9 = vector.load %arg2[%c0_7, %c0_8] : memref<32x128xf32, #tpu.memory_space<vmem>>, vector<32x128xf32>
    %cst_9 = arith.constant dense<0.000000e+00> : vector<8x128xf32>
    %10 = tpu.matmul %8, %9, %cst_9 {dimension_numbers = #tpu.dot_dimension_numbers<[1], [0], [0], [1], [0, 0, 1, 1], [], []>} : vector<8x32xf32>, vector<32x128xf32>, vector<8x128xf32> -> vector<8x128xf32>
    %11 = vector.broadcast %1 : vector<1x128xf32> to vector<8x128xf32>
    %12 = arith.addf %10, %11 : vector<8x128xf32>
    %c0_10 = arith.constant 0 : index
    %c0_11 = arith.constant 0 : index
    %13 = vector.load %arg5[%c0_10, %c0_11] : memref<8x128xf32, #tpu.memory_space<vmem>>, vector<8x128xf32>
    tpu.vector_store %arg5[%c0_10, %c0_11], %12 {strides = array<i32>} : memref<8x128xf32, #tpu.memory_space<vmem>>, vector<8x128xf32>,
    %cst_12 = arith.constant dense<0xFF800000> : vector<128xf32>
    %14 = vector.multi_reduction <maximumf>, %12, %cst_12 [0] : vector<8x128xf32> to vector<128xf32>
    %15 = vector.shape_cast %14 : vector<128xf32> to vector<1x128xf32>
    %16 = vector.broadcast %15 : vector<1x128xf32> to vector<8x128xf32>
    %17 = arith.subf %12, %16 : vector<8x128xf32>
    %18 = math.exp %17 : vector<8x128xf32>
    %cst_13 = arith.constant dense<0.000000e+00> : vector<128xf32>
    %19 = vector.multi_reduction <add>, %18, %cst_13 [0] : vector<8x128xf32> to vector<128xf32>
    %20 = vector.shape_cast %19 : vector<128xf32> to vector<1x128xf32>
    %21 = math.log %20 : vector<1x128xf32>
    %22 = arith.addf %15, %21 : vector<1x128xf32>
    %23 = vector.broadcast %22 : vector<1x128xf32> to vector<8x128xf32>
    %24 = arith.subf %12, %23 : vector<8x128xf32>
    %c0_14 = arith.constant 0 : index
    %c0_15 = arith.constant 0 : index
    %25 = vector.load %arg4[%c0_14, %c0_15] : memref<8x128xf32, #tpu.memory_space<vmem>>, vector<8x128xf32>
    %26 = arith.addf %24, %25 : vector<8x128xf32>
    %27 = tpu.iota {dimensions = array<i32: 1>} : vector<8x128xi32>
    %28 = arith.sitofp %27 : vector<8x128xi32> to vector<8x128xf32>
    %c8_i32 = arith.constant 8 : i32
    %c0_i32 = arith.constant 0 : i32
    %29 = arith.cmpi eq, %c8_i32, %c0_i32 : i32
    %c1_i32 = arith.constant 1 : i32
    %30 = arith.select %29, %c1_i32, %c8_i32 : i32
    %31 = vector.broadcast %30 : i32 to vector<8x128xi32>
    %32 = arith.remsi %27, %31 : vector<8x128xi32>
    %c0_i32_16 = arith.constant 0 : i32
    %33 = vector.broadcast %c0_i32_16 : i32 to vector<8x128xi32>
    %34 = arith.cmpi ne, %32, %33 : vector<8x128xi32>
    %c0_i32_17 = arith.constant 0 : i32
    %35 = vector.broadcast %c0_i32_17 : i32 to vector<8x128xi32>
    %36 = arith.cmpi slt, %32, %35 : vector<8x128xi32>
    %c0_i32_18 = arith.constant 0 : i32
    %37 = arith.cmpi slt, %30, %c0_i32_18 : i32
    %38 = vector.broadcast %37 : i1 to vector<8x128xi1>
    %39 = vector.broadcast %38 : vector<8x128xi1> to vector<8x128xi1>
    %40 = arith.xori %36, %39 : vector<8x128xi1>
    %41 = arith.andi %40, %34 : vector<8x128xi1>
    %42 = vector.broadcast %30 : i32 to vector<8x128xi32>
    %43 = arith.addi %32, %42 : vector<8x128xi32>
    %44 = arith.select %41, %43, %32 : vector<8x128xi1>, vector<8x128xi32>
    %c8_i32_19 = arith.constant 8 : i32
    %c0_i32_20 = arith.constant 0 : i32
    %45 = arith.cmpi eq, %c8_i32_19, %c0_i32_20 : i32
    %c1_i32_21 = arith.constant 1 : i32
    %46 = arith.select %45, %c1_i32_21, %c8_i32_19 : i32
    %47 = vector.broadcast %46 : i32 to vector<8x128xi32>
    %48 = arith.remsi %44, %47 : vector<8x128xi32>
    %c0_i32_22 = arith.constant 0 : i32
    %49 = vector.broadcast %c0_i32_22 : i32 to vector<8x128xi32>
    %50 = arith.cmpi ne, %48, %49 : vector<8x128xi32>
    %c0_i32_23 = arith.constant 0 : i32
    %51 = vector.broadcast %c0_i32_23 : i32 to vector<8x128xi32>
    %52 = arith.cmpi slt, %48, %51 : vector<8x128xi32>
    %c0_i32_24 = arith.constant 0 : i32
    %53 = arith.cmpi slt, %46, %c0_i32_24 : i32
    %54 = vector.broadcast %53 : i1 to vector<8x128xi1>
    %55 = vector.broadcast %54 : vector<8x128xi1> to vector<8x128xi1>
    %56 = arith.xori %52, %55 : vector<8x128xi1>
    %57 = arith.andi %56, %50 : vector<8x128xi1>
    %58 = vector.broadcast %46 : i32 to vector<8x128xi32>
    %59 = arith.addi %48, %58 : vector<8x128xi32>
    %60 = arith.select %57, %59, %48 : vector<8x128xi1>, vector<8x128xi32>
    %c4_i32 = arith.constant 4 : i32
    %61 = vector.broadcast %c4_i32 : i32 to vector<8x128xi32>
    %62 = arith.cmpi slt, %60, %61 : vector<8x128xi32>
    %cst_25 = arith.constant 4.000000e+00 : f32
    %63 = vector.broadcast %cst_25 : f32 to vector<8x128xf32>
    %64 = arith.addf %28, %63 : vector<8x128xf32>
    %cst_26 = arith.constant 4.000000e+00 : f32
    %65 = vector.broadcast %cst_26 : f32 to vector<8x128xf32>
    %66 = arith.subf %28, %65 : vector<8x128xf32>
    %67 = arith.select %62, %64, %66 : vector<8x128xi1>, vector<8x128xf32>
    %c4_i32_27 = arith.constant 4 : i32
    %68 = tpu.dynamic_rotate %28 by %c4_i32_27 dim 1 : vector<8x128xf32>, i32 -> vector<8x128xf32>
    %69 = arith.cmpf oeq, %68, %67 : vector<8x128xf32>
    %c4_i32_28 = arith.constant 4 : i32
    %c0_i32_29 = arith.constant 0 : i32
    %70 = arith.cmpi eq, %c4_i32_28, %c0_i32_29 : i32
    %c1_i32_30 = arith.constant 1 : i32
    %71 = arith.select %70, %c1_i32_30, %c4_i32_28 : i32
    %72 = vector.broadcast %71 : i32 to vector<8x128xi32>
    %73 = arith.remsi %44, %72 : vector<8x128xi32>
    %c0_i32_31 = arith.constant 0 : i32
    %74 = vector.broadcast %c0_i32_31 : i32 to vector<8x128xi32>
    %75 = arith.cmpi ne, %73, %74 : vector<8x128xi32>
    %c0_i32_32 = arith.constant 0 : i32
    %76 = vector.broadcast %c0_i32_32 : i32 to vector<8x128xi32>
    %77 = arith.cmpi slt, %73, %76 : vector<8x128xi32>
    %c0_i32_33 = arith.constant 0 : i32
    %78 = arith.cmpi slt, %71, %c0_i32_33 : i32
    %79 = vector.broadcast %78 : i1 to vector<8x128xi1>
    %80 = vector.broadcast %79 : vector<8x128xi1> to vector<8x128xi1>
    %81 = arith.xori %77, %80 : vector<8x128xi1>
    %82 = arith.andi %81, %75 : vector<8x128xi1>
    %83 = vector.broadcast %71 : i32 to vector<8x128xi32>
    %84 = arith.addi %73, %83 : vector<8x128xi32>
    %85 = arith.select %82, %84, %73 : vector<8x128xi1>, vector<8x128xi32>
    %c2_i32 = arith.constant 2 : i32
    %86 = vector.broadcast %c2_i32 : i32 to vector<8x128xi32>
    %87 = arith.cmpi slt, %85, %86 : vector<8x128xi32>
    %cst_34 = arith.constant 2.000000e+00 : f32
    %88 = vector.broadcast %cst_34 : f32 to vector<8x128xf32>
    %89 = arith.addf %28, %88 : vector<8x128xf32>
    %cst_35 = arith.constant 2.000000e+00 : f32
    %90 = vector.broadcast %cst_35 : f32 to vector<8x128xf32>
    %91 = arith.subf %28, %90 : vector<8x128xf32>
    %92 = arith.select %87, %89, %91 : vector<8x128xi1>, vector<8x128xf32>
    %c2_i32_36 = arith.constant 2 : i32
    %93 = tpu.dynamic_rotate %28 by %c2_i32_36 dim 1 : vector<8x128xf32>, i32 -> vector<8x128xf32>
    %94 = arith.cmpf oeq, %93, %92 : vector<8x128xf32>
    %c2_i32_37 = arith.constant 2 : i32
    %c0_i32_38 = arith.constant 0 : i32
    %95 = arith.cmpi eq, %c2_i32_37, %c0_i32_38 : i32
    %c1_i32_39 = arith.constant 1 : i32
    %96 = arith.select %95, %c1_i32_39, %c2_i32_37 : i32
    %97 = vector.broadcast %96 : i32 to vector<8x128xi32>
    %98 = arith.remsi %44, %97 : vector<8x128xi32>
    %c0_i32_40 = arith.constant 0 : i32
    %99 = vector.broadcast %c0_i32_40 : i32 to vector<8x128xi32>
    %100 = arith.cmpi ne, %98, %99 : vector<8x128xi32>
    %c0_i32_41 = arith.constant 0 : i32
    %101 = vector.broadcast %c0_i32_41 : i32 to vector<8x128xi32>
    %102 = arith.cmpi slt, %98, %101 : vector<8x128xi32>
    %c0_i32_42 = arith.constant 0 : i32
    %103 = arith.cmpi slt, %96, %c0_i32_42 : i32
    %104 = vector.broadcast %103 : i1 to vector<8x128xi1>
    %105 = vector.broadcast %104 : vector<8x128xi1> to vector<8x128xi1>
    %106 = arith.xori %102, %105 : vector<8x128xi1>
    %107 = arith.andi %106, %100 : vector<8x128xi1>
    %108 = vector.broadcast %96 : i32 to vector<8x128xi32>
    %109 = arith.addi %98, %108 : vector<8x128xi32>
    %110 = arith.select %107, %109, %98 : vector<8x128xi1>, vector<8x128xi32>
    %c1_i32_43 = arith.constant 1 : i32
    %111 = vector.broadcast %c1_i32_43 : i32 to vector<8x128xi32>
    %112 = arith.cmpi slt, %110, %111 : vector<8x128xi32>
    %cst_44 = arith.constant 1.000000e+00 : f32
    %113 = vector.broadcast %cst_44 : f32 to vector<8x128xf32>
    %114 = arith.addf %28, %113 : vector<8x128xf32>
    %cst_45 = arith.constant 1.000000e+00 : f32
    %115 = vector.broadcast %cst_45 : f32 to vector<8x128xf32>
    %116 = arith.subf %28, %115 : vector<8x128xf32>
    %117 = arith.select %112, %114, %116 : vector<8x128xi1>, vector<8x128xf32>
    %c1_i32_46 = arith.constant 1 : i32
    %118 = tpu.dynamic_rotate %28 by %c1_i32_46 dim 1 : vector<8x128xf32>, i32 -> vector<8x128xf32>
    %119 = arith.cmpf oeq, %118, %117 : vector<8x128xf32>
    %c4_i32_47 = arith.constant 4 : i32
    %120 = tpu.dynamic_rotate %26 by %c4_i32_47 dim 1 : vector<8x128xf32>, i32 -> vector<8x128xf32>
    %c124_i32 = arith.constant 124 : i32
    %121 = tpu.dynamic_rotate %26 by %c124_i32 dim 1 : vector<8x128xf32>, i32 -> vector<8x128xf32>
    %122 = arith.select %69, %120, %121 : vector<8x128xi1>, vector<8x128xf32>
    %123 = arith.maximumf %26, %122 : vector<8x128xf32>
    %c2_i32_48 = arith.constant 2 : i32
    %124 = tpu.dynamic_rotate %123 by %c2_i32_48 dim 1 : vector<8x128xf32>, i32 -> vector<8x128xf32>
    %c126_i32 = arith.constant 126 : i32
    %125 = tpu.dynamic_rotate %123 by %c126_i32 dim 1 : vector<8x128xf32>, i32 -> vector<8x128xf32>
    %126 = arith.select %94, %124, %125 : vector<8x128xi1>, vector<8x128xf32>
    %127 = arith.maximumf %123, %126 : vector<8x128xf32>
    %c1_i32_49 = arith.constant 1 : i32
    %128 = tpu.dynamic_rotate %127 by %c1_i32_49 dim 1 : vector<8x128xf32>, i32 -> vector<8x128xf32>
    %c127_i32 = arith.constant 127 : i32
    %129 = tpu.dynamic_rotate %127 by %c127_i32 dim 1 : vector<8x128xf32>, i32 -> vector<8x128xf32>
    %130 = arith.select %119, %128, %129 : vector<8x128xi1>, vector<8x128xf32>
    %131 = arith.maximumf %127, %130 : vector<8x128xf32>
    %132 = arith.subf %26, %131 : vector<8x128xf32>
    %133 = math.exp %132 : vector<8x128xf32>
    %c4_i32_50 = arith.constant 4 : i32
    %134 = tpu.dynamic_rotate %133 by %c4_i32_50 dim 1 : vector<8x128xf32>, i32 -> vector<8x128xf32>
    %c124_i32_51 = arith.constant 124 : i32
    %135 = tpu.dynamic_rotate %133 by %c124_i32_51 dim 1 : vector<8x128xf32>, i32 -> vector<8x128xf32>
    %136 = arith.select %69, %134, %135 : vector<8x128xi1>, vector<8x128xf32>
    %137 = arith.addf %133, %136 : vector<8x128xf32>
    %c2_i32_52 = arith.constant 2 : i32
    %138 = tpu.dynamic_rotate %137 by %c2_i32_52 dim 1 : vector<8x128xf32>, i32 -> vector<8x128xf32>
    %c126_i32_53 = arith.constant 126 : i32
    %139 = tpu.dynamic_rotate %137 by %c126_i32_53 dim 1 : vector<8x128xf32>, i32 -> vector<8x128xf32>
    %140 = arith.select %94, %138, %139 : vector<8x128xi1>, vector<8x128xf32>
    %141 = arith.addf %137, %140 : vector<8x128xf32>
    %c1_i32_54 = arith.constant 1 : i32
    %142 = tpu.dynamic_rotate %141 by %c1_i32_54 dim 1 : vector<8x128xf32>, i32 -> vector<8x128xf32>
    %c127_i32_55 = arith.constant 127 : i32
    %143 = tpu.dynamic_rotate %141 by %c127_i32_55 dim 1 : vector<8x128xf32>, i32 -> vector<8x128xf32>
    %144 = arith.select %119, %142, %143 : vector<8x128xi1>, vector<8x128xf32>
    %145 = arith.addf %141, %144 : vector<8x128xf32>
    %146 = math.log %145 : vector<8x128xf32>
    %147 = arith.addf %131, %146 : vector<8x128xf32>
    %148 = arith.subf %26, %147 : vector<8x128xf32>
    %149 = math.exp %148 : vector<8x128xf32>
    %cst_56 = arith.constant dense<0.000000e+00> : vector<128xf32>
    %150 = vector.multi_reduction <add>, %149, %cst_56 [0] : vector<8x128xf32> to vector<128xf32>
    %151 = vector.shape_cast %150 : vector<128xf32> to vector<1x128xf32>
    %152 = math.log %151 : vector<1x128xf32>
    %153 = vector.broadcast %152 : vector<1x128xf32> to vector<8x128xf32>
    %154 = arith.subf %148, %153 : vector<8x128xf32>
    %155 = math.exp %154 : vector<8x128xf32>
    %c4_i32_57 = arith.constant 4 : i32
    %156 = tpu.dynamic_rotate %155 by %c4_i32_57 dim 1 : vector<8x128xf32>, i32 -> vector<8x128xf32>
    %c124_i32_58 = arith.constant 124 : i32
    %157 = tpu.dynamic_rotate %155 by %c124_i32_58 dim 1 : vector<8x128xf32>, i32 -> vector<8x128xf32>
    %158 = arith.select %69, %156, %157 : vector<8x128xi1>, vector<8x128xf32>
    %159 = arith.addf %155, %158 : vector<8x128xf32>
    %c2_i32_59 = arith.constant 2 : i32
    %160 = tpu.dynamic_rotate %159 by %c2_i32_59 dim 1 : vector<8x128xf32>, i32 -> vector<8x128xf32>
    %c126_i32_60 = arith.constant 126 : i32
    %161 = tpu.dynamic_rotate %159 by %c126_i32_60 dim 1 : vector<8x128xf32>, i32 -> vector<8x128xf32>
    %162 = arith.select %94, %160, %161 : vector<8x128xi1>, vector<8x128xf32>
    %163 = arith.addf %159, %162 : vector<8x128xf32>
    %c1_i32_61 = arith.constant 1 : i32
    %164 = tpu.dynamic_rotate %163 by %c1_i32_61 dim 1 : vector<8x128xf32>, i32 -> vector<8x128xf32>
    %c127_i32_62 = arith.constant 127 : i32
    %165 = tpu.dynamic_rotate %163 by %c127_i32_62 dim 1 : vector<8x128xf32>, i32 -> vector<8x128xf32>
    %166 = arith.select %119, %164, %165 : vector<8x128xi1>, vector<8x128xf32>
    %167 = arith.addf %163, %166 : vector<8x128xf32>
    %168 = math.log %167 : vector<8x128xf32>
    %169 = arith.subf %154, %168 : vector<8x128xf32>
    %170 = math.exp %169 : vector<8x128xf32>
    %cst_63 = arith.constant dense<0.000000e+00> : vector<128xf32>
    %171 = vector.multi_reduction <add>, %170, %cst_63 [0] : vector<8x128xf32> to vector<128xf32>
    %172 = vector.shape_cast %171 : vector<128xf32> to vector<1x128xf32>
    %173 = math.log %172 : vector<1x128xf32>
    %174 = vector.broadcast %173 : vector<1x128xf32> to vector<8x128xf32>
    %175 = arith.subf %169, %174 : vector<8x128xf32>
    %176 = math.exp %175 : vector<8x128xf32>
    %c4_i32_64 = arith.constant 4 : i32
    %177 = tpu.dynamic_rotate %176 by %c4_i32_64 dim 1 : vector<8x128xf32>, i32 -> vector<8x128xf32>
    %c124_i32_65 = arith.constant 124 : i32
    %178 = tpu.dynamic_rotate %176 by %c124_i32_65 dim 1 : vector<8x128xf32>, i32 -> vector<8x128xf32>
    %179 = arith.select %69, %177, %178 : vector<8x128xi1>, vector<8x128xf32>
    %180 = arith.addf %176, %179 : vector<8x128xf32>
    %c2_i32_66 = arith.constant 2 : i32
    %181 = tpu.dynamic_rotate %180 by %c2_i32_66 dim 1 : vector<8x128xf32>, i32 -> vector<8x128xf32>
    %c126_i32_67 = arith.constant 126 : i32
    %182 = tpu.dynamic_rotate %180 by %c126_i32_67 dim 1 : vector<8x128xf32>, i32 -> vector<8x128xf32>
    %183 = arith.select %94, %181, %182 : vector<8x128xi1>, vector<8x128xf32>
    %184 = arith.addf %180, %183 : vector<8x128xf32>
    %c1_i32_68 = arith.constant 1 : i32
    %185 = tpu.dynamic_rotate %184 by %c1_i32_68 dim 1 : vector<8x128xf32>, i32 -> vector<8x128xf32>
    %c127_i32_69 = arith.constant 127 : i32
    %186 = tpu.dynamic_rotate %184 by %c127_i32_69 dim 1 : vector<8x128xf32>, i32 -> vector<8x128xf32>
    %187 = arith.select %119, %185, %186 : vector<8x128xi1>, vector<8x128xf32>
    %188 = arith.addf %184, %187 : vector<8x128xf32>
    %189 = math.log %188 : vector<8x128xf32>
    %190 = arith.subf %175, %189 : vector<8x128xf32>
    %191 = math.exp %190 : vector<8x128xf32>
    %cst_70 = arith.constant dense<0.000000e+00> : vector<128xf32>
    %192 = vector.multi_reduction <add>, %191, %cst_70 [0] : vector<8x128xf32> to vector<128xf32>
    %193 = vector.shape_cast %192 : vector<128xf32> to vector<1x128xf32>
    %194 = math.log %193 : vector<1x128xf32>
    %195 = vector.broadcast %194 : vector<1x128xf32> to vector<8x128xf32>
    %196 = arith.subf %190, %195 : vector<8x128xf32>
    %197 = math.exp %196 : vector<8x128xf32>
    %c4_i32_71 = arith.constant 4 : i32
    %198 = tpu.dynamic_rotate %197 by %c4_i32_71 dim 1 : vector<8x128xf32>, i32 -> vector<8x128xf32>
    %c124_i32_72 = arith.constant 124 : i32
    %199 = tpu.dynamic_rotate %197 by %c124_i32_72 dim 1 : vector<8x128xf32>, i32 -> vector<8x128xf32>
    %200 = arith.select %69, %198, %199 : vector<8x128xi1>, vector<8x128xf32>
    %201 = arith.addf %197, %200 : vector<8x128xf32>
    %c2_i32_73 = arith.constant 2 : i32
    %202 = tpu.dynamic_rotate %201 by %c2_i32_73 dim 1 : vector<8x128xf32>, i32 -> vector<8x128xf32>
    %c126_i32_74 = arith.constant 126 : i32
    %203 = tpu.dynamic_rotate %201 by %c126_i32_74 dim 1 : vector<8x128xf32>, i32 -> vector<8x128xf32>
    %204 = arith.select %94, %202, %203 : vector<8x128xi1>, vector<8x128xf32>
    %205 = arith.addf %201, %204 : vector<8x128xf32>
    %c1_i32_75 = arith.constant 1 : i32
    %206 = tpu.dynamic_rotate %205 by %c1_i32_75 dim 1 : vector<8x128xf32>, i32 -> vector<8x128xf32>
    %c127_i32_76 = arith.constant 127 : i32
    %207 = tpu.dynamic_rotate %205 by %c127_i32_76 dim 1 : vector<8x128xf32>, i32 -> vector<8x128xf32>
    %208 = arith.select %119, %206, %207 : vector<8x128xi1>, vector<8x128xf32>
    %209 = arith.addf %205, %208 : vector<8x128xf32>
    %210 = math.log %209 : vector<8x128xf32>
    %211 = arith.subf %196, %210 : vector<8x128xf32>
    %212 = math.exp %211 : vector<8x128xf32>
    %cst_77 = arith.constant dense<0.000000e+00> : vector<128xf32>
    %213 = vector.multi_reduction <add>, %212, %cst_77 [0] : vector<8x128xf32> to vector<128xf32>
    %214 = vector.shape_cast %213 : vector<128xf32> to vector<1x128xf32>
    %215 = math.log %214 : vector<1x128xf32>
    %216 = vector.broadcast %215 : vector<1x128xf32> to vector<8x128xf32>
    %217 = arith.subf %211, %216 : vector<8x128xf32>
    %218 = math.exp %217 : vector<8x128xf32>
    %c4_i32_78 = arith.constant 4 : i32
    %219 = tpu.dynamic_rotate %218 by %c4_i32_78 dim 1 : vector<8x128xf32>, i32 -> vector<8x128xf32>
    %c124_i32_79 = arith.constant 124 : i32
    %220 = tpu.dynamic_rotate %218 by %c124_i32_79 dim 1 : vector<8x128xf32>, i32 -> vector<8x128xf32>
    %221 = arith.select %69, %219, %220 : vector<8x128xi1>, vector<8x128xf32>
    %222 = arith.addf %218, %221 : vector<8x128xf32>
    %c2_i32_80 = arith.constant 2 : i32
    %223 = tpu.dynamic_rotate %222 by %c2_i32_80 dim 1 : vector<8x128xf32>, i32 -> vector<8x128xf32>
    %c126_i32_81 = arith.constant 126 : i32
    %224 = tpu.dynamic_rotate %222 by %c126_i32_81 dim 1 : vector<8x128xf32>, i32 -> vector<8x128xf32>
    %225 = arith.select %94, %223, %224 : vector<8x128xi1>, vector<8x128xf32>
    %226 = arith.addf %222, %225 : vector<8x128xf32>
    %c1_i32_82 = arith.constant 1 : i32
    %227 = tpu.dynamic_rotate %226 by %c1_i32_82 dim 1 : vector<8x128xf32>, i32 -> vector<8x128xf32>
    %c127_i32_83 = arith.constant 127 : i32
    %228 = tpu.dynamic_rotate %226 by %c127_i32_83 dim 1 : vector<8x128xf32>, i32 -> vector<8x128xf32>
    %229 = arith.select %119, %227, %228 : vector<8x128xi1>, vector<8x128xf32>
    %230 = arith.addf %226, %229 : vector<8x128xf32>
    %231 = math.log %230 : vector<8x128xf32>
    %232 = arith.subf %217, %231 : vector<8x128xf32>
    %233 = math.exp %232 : vector<8x128xf32>
    %cst_84 = arith.constant dense<0.000000e+00> : vector<128xf32>
    %234 = vector.multi_reduction <add>, %233, %cst_84 [0] : vector<8x128xf32> to vector<128xf32>
    %235 = vector.shape_cast %234 : vector<128xf32> to vector<1x128xf32>
    %236 = math.log %235 : vector<1x128xf32>
    %237 = vector.broadcast %236 : vector<1x128xf32> to vector<8x128xf32>
    %238 = arith.subf %232, %237 : vector<8x128xf32>
    %239 = math.exp %238 : vector<8x128xf32>
    %c4_i32_85 = arith.constant 4 : i32
    %240 = tpu.dynamic_rotate %239 by %c4_i32_85 dim 1 : vector<8x128xf32>, i32 -> vector<8x128xf32>
    %c124_i32_86 = arith.constant 124 : i32
    %241 = tpu.dynamic_rotate %239 by %c124_i32_86 dim 1 : vector<8x128xf32>, i32 -> vector<8x128xf32>
    %242 = arith.select %69, %240, %241 : vector<8x128xi1>, vector<8x128xf32>
    %243 = arith.addf %239, %242 : vector<8x128xf32>
    %c2_i32_87 = arith.constant 2 : i32
    %244 = tpu.dynamic_rotate %243 by %c2_i32_87 dim 1 : vector<8x128xf32>, i32 -> vector<8x128xf32>
    %c126_i32_88 = arith.constant 126 : i32
    %245 = tpu.dynamic_rotate %243 by %c126_i32_88 dim 1 : vector<8x128xf32>, i32 -> vector<8x128xf32>
    %246 = arith.select %94, %244, %245 : vector<8x128xi1>, vector<8x128xf32>
    %247 = arith.addf %243, %246 : vector<8x128xf32>
    %c1_i32_89 = arith.constant 1 : i32
    %248 = tpu.dynamic_rotate %247 by %c1_i32_89 dim 1 : vector<8x128xf32>, i32 -> vector<8x128xf32>
    %c127_i32_90 = arith.constant 127 : i32
    %249 = tpu.dynamic_rotate %247 by %c127_i32_90 dim 1 : vector<8x128xf32>, i32 -> vector<8x128xf32>
    %250 = arith.select %119, %248, %249 : vector<8x128xi1>, vector<8x128xf32>
    %251 = arith.addf %247, %250 : vector<8x128xf32>
    %252 = math.log %251 : vector<8x128xf32>
    %253 = arith.subf %238, %252 : vector<8x128xf32>
    %254 = math.exp %253 : vector<8x128xf32>
    %cst_91 = arith.constant dense<0.000000e+00> : vector<128xf32>
    %255 = vector.multi_reduction <add>, %254, %cst_91 [0] : vector<8x128xf32> to vector<128xf32>
    %256 = vector.shape_cast %255 : vector<128xf32> to vector<1x128xf32>
    %257 = math.log %256 : vector<1x128xf32>
    %258 = vector.broadcast %257 : vector<1x128xf32> to vector<8x128xf32>
    %259 = arith.subf %253, %258 : vector<8x128xf32>
    %260 = math.exp %259 : vector<8x128xf32>
    %c4_i32_92 = arith.constant 4 : i32
    %261 = tpu.dynamic_rotate %260 by %c4_i32_92 dim 1 : vector<8x128xf32>, i32 -> vector<8x128xf32>
    %c124_i32_93 = arith.constant 124 : i32
    %262 = tpu.dynamic_rotate %260 by %c124_i32_93 dim 1 : vector<8x128xf32>, i32 -> vector<8x128xf32>
    %263 = arith.select %69, %261, %262 : vector<8x128xi1>, vector<8x128xf32>
    %264 = arith.addf %260, %263 : vector<8x128xf32>
    %c2_i32_94 = arith.constant 2 : i32
    %265 = tpu.dynamic_rotate %264 by %c2_i32_94 dim 1 : vector<8x128xf32>, i32 -> vector<8x128xf32>
    %c126_i32_95 = arith.constant 126 : i32
    %266 = tpu.dynamic_rotate %264 by %c126_i32_95 dim 1 : vector<8x128xf32>, i32 -> vector<8x128xf32>
    %267 = arith.select %94, %265, %266 : vector<8x128xi1>, vector<8x128xf32>
    %268 = arith.addf %264, %267 : vector<8x128xf32>
    %c1_i32_96 = arith.constant 1 : i32
    %269 = tpu.dynamic_rotate %268 by %c1_i32_96 dim 1 : vector<8x128xf32>, i32 -> vector<8x128xf32>
    %c127_i32_97 = arith.constant 127 : i32
    %270 = tpu.dynamic_rotate %268 by %c127_i32_97 dim 1 : vector<8x128xf32>, i32 -> vector<8x128xf32>
    %271 = arith.select %119, %269, %270 : vector<8x128xi1>, vector<8x128xf32>
    %272 = arith.addf %268, %271 : vector<8x128xf32>
    %273 = math.log %272 : vector<8x128xf32>
    %274 = arith.subf %259, %273 : vector<8x128xf32>
    %275 = math.exp %274 : vector<8x128xf32>
    %cst_98 = arith.constant dense<0.000000e+00> : vector<128xf32>
    %276 = vector.multi_reduction <add>, %275, %cst_98 [0] : vector<8x128xf32> to vector<128xf32>
    %277 = vector.shape_cast %276 : vector<128xf32> to vector<1x128xf32>
    %278 = math.log %277 : vector<1x128xf32>
    %279 = vector.broadcast %278 : vector<1x128xf32> to vector<8x128xf32>
    %280 = arith.subf %274, %279 : vector<8x128xf32>
    %281 = math.exp %280 : vector<8x128xf32>
    %c4_i32_99 = arith.constant 4 : i32
    %282 = tpu.dynamic_rotate %281 by %c4_i32_99 dim 1 : vector<8x128xf32>, i32 -> vector<8x128xf32>
    %c124_i32_100 = arith.constant 124 : i32
    %283 = tpu.dynamic_rotate %281 by %c124_i32_100 dim 1 : vector<8x128xf32>, i32 -> vector<8x128xf32>
    %284 = arith.select %69, %282, %283 : vector<8x128xi1>, vector<8x128xf32>
    %285 = arith.addf %281, %284 : vector<8x128xf32>
    %c2_i32_101 = arith.constant 2 : i32
    %286 = tpu.dynamic_rotate %285 by %c2_i32_101 dim 1 : vector<8x128xf32>, i32 -> vector<8x128xf32>
    %c126_i32_102 = arith.constant 126 : i32
    %287 = tpu.dynamic_rotate %285 by %c126_i32_102 dim 1 : vector<8x128xf32>, i32 -> vector<8x128xf32>
    %288 = arith.select %94, %286, %287 : vector<8x128xi1>, vector<8x128xf32>
    %289 = arith.addf %285, %288 : vector<8x128xf32>
    %c1_i32_103 = arith.constant 1 : i32
    %290 = tpu.dynamic_rotate %289 by %c1_i32_103 dim 1 : vector<8x128xf32>, i32 -> vector<8x128xf32>
    %c127_i32_104 = arith.constant 127 : i32
    %291 = tpu.dynamic_rotate %289 by %c127_i32_104 dim 1 : vector<8x128xf32>, i32 -> vector<8x128xf32>
    %292 = arith.select %119, %290, %291 : vector<8x128xi1>, vector<8x128xf32>
    %293 = arith.addf %289, %292 : vector<8x128xf32>
    %294 = math.log %293 : vector<8x128xf32>
    %295 = arith.subf %280, %294 : vector<8x128xf32>
    %296 = math.exp %295 : vector<8x128xf32>
    %cst_105 = arith.constant dense<0.000000e+00> : vector<128xf32>
    %297 = vector.multi_reduction <add>, %296, %cst_105 [0] : vector<8x128xf32> to vector<128xf32>
    %298 = vector.shape_cast %297 : vector<128xf32> to vector<1x128xf32>
    %299 = math.log %298 : vector<1x128xf32>
    %300 = vector.broadcast %299 : vector<1x128xf32> to vector<8x128xf32>
    %301 = arith.subf %295, %300 : vector<8x128xf32>
    %302 = math.exp %301 : vector<8x128xf32>
    %c4_i32_106 = arith.constant 4 : i32
    %303 = tpu.dynamic_rotate %302 by %c4_i32_106 dim 1 : vector<8x128xf32>, i32 -> vector<8x128xf32>
    %c124_i32_107 = arith.constant 124 : i32
    %304 = tpu.dynamic_rotate %302 by %c124_i32_107 dim 1 : vector<8x128xf32>, i32 -> vector<8x128xf32>
    %305 = arith.select %69, %303, %304 : vector<8x128xi1>, vector<8x128xf32>
    %306 = arith.addf %302, %305 : vector<8x128xf32>
    %c2_i32_108 = arith.constant 2 : i32
    %307 = tpu.dynamic_rotate %306 by %c2_i32_108 dim 1 : vector<8x128xf32>, i32 -> vector<8x128xf32>
    %c126_i32_109 = arith.constant 126 : i32
    %308 = tpu.dynamic_rotate %306 by %c126_i32_109 dim 1 : vector<8x128xf32>, i32 -> vector<8x128xf32>
    %309 = arith.select %94, %307, %308 : vector<8x128xi1>, vector<8x128xf32>
    %310 = arith.addf %306, %309 : vector<8x128xf32>
    %c1_i32_110 = arith.constant 1 : i32
    %311 = tpu.dynamic_rotate %310 by %c1_i32_110 dim 1 : vector<8x128xf32>, i32 -> vector<8x128xf32>
    %c127_i32_111 = arith.constant 127 : i32
    %312 = tpu.dynamic_rotate %310 by %c127_i32_111 dim 1 : vector<8x128xf32>, i32 -> vector<8x128xf32>
    %313 = arith.select %119, %311, %312 : vector<8x128xi1>, vector<8x128xf32>
    %314 = arith.addf %310, %313 : vector<8x128xf32>
    %315 = math.log %314 : vector<8x128xf32>
    %316 = arith.subf %301, %315 : vector<8x128xf32>
    %317 = math.exp %316 : vector<8x128xf32>
    %cst_112 = arith.constant dense<0.000000e+00> : vector<128xf32>
    %318 = vector.multi_reduction <add>, %317, %cst_112 [0] : vector<8x128xf32> to vector<128xf32>
    %319 = vector.shape_cast %318 : vector<128xf32> to vector<1x128xf32>
    %320 = math.log %319 : vector<1x128xf32>
    %321 = vector.broadcast %320 : vector<1x128xf32> to vector<8x128xf32>
    %322 = arith.subf %316, %321 : vector<8x128xf32>
    %323 = math.exp %322 : vector<8x128xf32>
    %c4_i32_113 = arith.constant 4 : i32
    %324 = tpu.dynamic_rotate %323 by %c4_i32_113 dim 1 : vector<8x128xf32>, i32 -> vector<8x128xf32>
    %c124_i32_114 = arith.constant 124 : i32
    %325 = tpu.dynamic_rotate %323 by %c124_i32_114 dim 1 : vector<8x128xf32>, i32 -> vector<8x128xf32>
    %326 = arith.select %69, %324, %325 : vector<8x128xi1>, vector<8x128xf32>
    %327 = arith.addf %323, %326 : vector<8x128xf32>
    %c2_i32_115 = arith.constant 2 : i32
    %328 = tpu.dynamic_rotate %327 by %c2_i32_115 dim 1 : vector<8x128xf32>, i32 -> vector<8x128xf32>
    %c126_i32_116 = arith.constant 126 : i32
    %329 = tpu.dynamic_rotate %327 by %c126_i32_116 dim 1 : vector<8x128xf32>, i32 -> vector<8x128xf32>
    %330 = arith.select %94, %328, %329 : vector<8x128xi1>, vector<8x128xf32>
    %331 = arith.addf %327, %330 : vector<8x128xf32>
    %c1_i32_117 = arith.constant 1 : i32
    %332 = tpu.dynamic_rotate %331 by %c1_i32_117 dim 1 : vector<8x128xf32>, i32 -> vector<8x128xf32>
    %c127_i32_118 = arith.constant 127 : i32
    %333 = tpu.dynamic_rotate %331 by %c127_i32_118 dim 1 : vector<8x128xf32>, i32 -> vector<8x128xf32>
    %334 = arith.select %119, %332, %333 : vector<8x128xi1>, vector<8x128xf32>
    %335 = arith.addf %331, %334 : vector<8x128xf32>
    %336 = math.log %335 : vector<8x128xf32>
    %337 = arith.subf %322, %336 : vector<8x128xf32>
    %338 = math.exp %337 : vector<8x128xf32>
    %cst_119 = arith.constant dense<0.000000e+00> : vector<128xf32>
    %339 = vector.multi_reduction <add>, %338, %cst_119 [0] : vector<8x128xf32> to vector<128xf32>
    %340 = vector.shape_cast %339 : vector<128xf32> to vector<1x128xf32>
    %341 = math.log %340 : vector<1x128xf32>
    %342 = vector.broadcast %341 : vector<1x128xf32> to vector<8x128xf32>
    %343 = arith.subf %337, %342 : vector<8x128xf32>
    %344 = math.exp %343 : vector<8x128xf32>
    %c4_i32_120 = arith.constant 4 : i32
    %345 = tpu.dynamic_rotate %344 by %c4_i32_120 dim 1 : vector<8x128xf32>, i32 -> vector<8x128xf32>
    %c124_i32_121 = arith.constant 124 : i32
    %346 = tpu.dynamic_rotate %344 by %c124_i32_121 dim 1 : vector<8x128xf32>, i32 -> vector<8x128xf32>
    %347 = arith.select %69, %345, %346 : vector<8x128xi1>, vector<8x128xf32>
    %348 = arith.addf %344, %347 : vector<8x128xf32>
    %c2_i32_122 = arith.constant 2 : i32
    %349 = tpu.dynamic_rotate %348 by %c2_i32_122 dim 1 : vector<8x128xf32>, i32 -> vector<8x128xf32>
    %c126_i32_123 = arith.constant 126 : i32
    %350 = tpu.dynamic_rotate %348 by %c126_i32_123 dim 1 : vector<8x128xf32>, i32 -> vector<8x128xf32>
    %351 = arith.select %94, %349, %350 : vector<8x128xi1>, vector<8x128xf32>
    %352 = arith.addf %348, %351 : vector<8x128xf32>
    %c1_i32_124 = arith.constant 1 : i32
    %353 = tpu.dynamic_rotate %352 by %c1_i32_124 dim 1 : vector<8x128xf32>, i32 -> vector<8x128xf32>
    %c127_i32_125 = arith.constant 127 : i32
    %354 = tpu.dynamic_rotate %352 by %c127_i32_125 dim 1 : vector<8x128xf32>, i32 -> vector<8x128xf32>
    %355 = arith.select %119, %353, %354 : vector<8x128xi1>, vector<8x128xf32>
    %356 = arith.addf %352, %355 : vector<8x128xf32>
    %357 = math.log %356 : vector<8x128xf32>
    %358 = arith.subf %343, %357 : vector<8x128xf32>
    %359 = math.exp %358 : vector<8x128xf32>
    %cst_126 = arith.constant dense<0.000000e+00> : vector<128xf32>
    %360 = vector.multi_reduction <add>, %359, %cst_126 [0] : vector<8x128xf32> to vector<128xf32>
    %361 = vector.shape_cast %360 : vector<128xf32> to vector<1x128xf32>
    %362 = math.log %361 : vector<1x128xf32>
    %363 = vector.broadcast %362 : vector<1x128xf32> to vector<8x128xf32>
    %364 = arith.subf %358, %363 : vector<8x128xf32>
    %365 = math.exp %364 : vector<8x128xf32>
    %c4_i32_127 = arith.constant 4 : i32
    %366 = tpu.dynamic_rotate %365 by %c4_i32_127 dim 1 : vector<8x128xf32>, i32 -> vector<8x128xf32>
    %c124_i32_128 = arith.constant 124 : i32
    %367 = tpu.dynamic_rotate %365 by %c124_i32_128 dim 1 : vector<8x128xf32>, i32 -> vector<8x128xf32>
    %368 = arith.select %69, %366, %367 : vector<8x128xi1>, vector<8x128xf32>
    %369 = arith.addf %365, %368 : vector<8x128xf32>
    %c2_i32_129 = arith.constant 2 : i32
    %370 = tpu.dynamic_rotate %369 by %c2_i32_129 dim 1 : vector<8x128xf32>, i32 -> vector<8x128xf32>
    %c126_i32_130 = arith.constant 126 : i32
    %371 = tpu.dynamic_rotate %369 by %c126_i32_130 dim 1 : vector<8x128xf32>, i32 -> vector<8x128xf32>
    %372 = arith.select %94, %370, %371 : vector<8x128xi1>, vector<8x128xf32>
    %373 = arith.addf %369, %372 : vector<8x128xf32>
    %c1_i32_131 = arith.constant 1 : i32
    %374 = tpu.dynamic_rotate %373 by %c1_i32_131 dim 1 : vector<8x128xf32>, i32 -> vector<8x128xf32>
    %c127_i32_132 = arith.constant 127 : i32
    %375 = tpu.dynamic_rotate %373 by %c127_i32_132 dim 1 : vector<8x128xf32>, i32 -> vector<8x128xf32>
    %376 = arith.select %119, %374, %375 : vector<8x128xi1>, vector<8x128xf32>
    %377 = arith.addf %373, %376 : vector<8x128xf32>
    %378 = math.log %377 : vector<8x128xf32>
    %379 = arith.subf %364, %378 : vector<8x128xf32>
    %380 = math.exp %379 : vector<8x128xf32>
    %cst_133 = arith.constant dense<0.000000e+00> : vector<128xf32>
    %381 = vector.multi_reduction <add>, %380, %cst_133 [0] : vector<8x128xf32> to vector<128xf32>
    %382 = vector.shape_cast %381 : vector<128xf32> to vector<1x128xf32>
    %383 = math.log %382 : vector<1x128xf32>
    %384 = vector.broadcast %383 : vector<1x128xf32> to vector<8x128xf32>
    %385 = arith.subf %379, %384 : vector<8x128xf32>
    %386 = math.exp %385 : vector<8x128xf32>
    %c4_i32_134 = arith.constant 4 : i32
    %387 = tpu.dynamic_rotate %386 by %c4_i32_134 dim 1 : vector<8x128xf32>, i32 -> vector<8x128xf32>
    %c124_i32_135 = arith.constant 124 : i32
    %388 = tpu.dynamic_rotate %386 by %c124_i32_135 dim 1 : vector<8x128xf32>, i32 -> vector<8x128xf32>
    %389 = arith.select %69, %387, %388 : vector<8x128xi1>, vector<8x128xf32>
    %390 = arith.addf %386, %389 : vector<8x128xf32>
    %c2_i32_136 = arith.constant 2 : i32
    %391 = tpu.dynamic_rotate %390 by %c2_i32_136 dim 1 : vector<8x128xf32>, i32 -> vector<8x128xf32>
    %c126_i32_137 = arith.constant 126 : i32
    %392 = tpu.dynamic_rotate %390 by %c126_i32_137 dim 1 : vector<8x128xf32>, i32 -> vector<8x128xf32>
    %393 = arith.select %94, %391, %392 : vector<8x128xi1>, vector<8x128xf32>
    %394 = arith.addf %390, %393 : vector<8x128xf32>
    %c1_i32_138 = arith.constant 1 : i32
    %395 = tpu.dynamic_rotate %394 by %c1_i32_138 dim 1 : vector<8x128xf32>, i32 -> vector<8x128xf32>
    %c127_i32_139 = arith.constant 127 : i32
    %396 = tpu.dynamic_rotate %394 by %c127_i32_139 dim 1 : vector<8x128xf32>, i32 -> vector<8x128xf32>
    %397 = arith.select %119, %395, %396 : vector<8x128xi1>, vector<8x128xf32>
    %398 = arith.addf %394, %397 : vector<8x128xf32>
    %399 = math.log %398 : vector<8x128xf32>
    %400 = arith.subf %385, %399 : vector<8x128xf32>
    %401 = math.exp %400 : vector<8x128xf32>
    %cst_140 = arith.constant dense<0.000000e+00> : vector<128xf32>
    %402 = vector.multi_reduction <add>, %401, %cst_140 [0] : vector<8x128xf32> to vector<128xf32>
    %403 = vector.shape_cast %402 : vector<128xf32> to vector<1x128xf32>
    %404 = math.log %403 : vector<1x128xf32>
    %405 = vector.broadcast %404 : vector<1x128xf32> to vector<8x128xf32>
    %406 = arith.subf %400, %405 : vector<8x128xf32>
    %407 = math.exp %406 : vector<8x128xf32>
    %c4_i32_141 = arith.constant 4 : i32
    %408 = tpu.dynamic_rotate %407 by %c4_i32_141 dim 1 : vector<8x128xf32>, i32 -> vector<8x128xf32>
    %c124_i32_142 = arith.constant 124 : i32
    %409 = tpu.dynamic_rotate %407 by %c124_i32_142 dim 1 : vector<8x128xf32>, i32 -> vector<8x128xf32>
    %410 = arith.select %69, %408, %409 : vector<8x128xi1>, vector<8x128xf32>
    %411 = arith.addf %407, %410 : vector<8x128xf32>
    %c2_i32_143 = arith.constant 2 : i32
    %412 = tpu.dynamic_rotate %411 by %c2_i32_143 dim 1 : vector<8x128xf32>, i32 -> vector<8x128xf32>
    %c126_i32_144 = arith.constant 126 : i32
    %413 = tpu.dynamic_rotate %411 by %c126_i32_144 dim 1 : vector<8x128xf32>, i32 -> vector<8x128xf32>
    %414 = arith.select %94, %412, %413 : vector<8x128xi1>, vector<8x128xf32>
    %415 = arith.addf %411, %414 : vector<8x128xf32>
    %c1_i32_145 = arith.constant 1 : i32
    %416 = tpu.dynamic_rotate %415 by %c1_i32_145 dim 1 : vector<8x128xf32>, i32 -> vector<8x128xf32>
    %c127_i32_146 = arith.constant 127 : i32
    %417 = tpu.dynamic_rotate %415 by %c127_i32_146 dim 1 : vector<8x128xf32>, i32 -> vector<8x128xf32>
    %418 = arith.select %119, %416, %417 : vector<8x128xi1>, vector<8x128xf32>
    %419 = arith.addf %415, %418 : vector<8x128xf32>
    %420 = math.log %419 : vector<8x128xf32>
    %421 = arith.subf %406, %420 : vector<8x128xf32>
    %422 = math.exp %421 : vector<8x128xf32>
    %cst_147 = arith.constant dense<0.000000e+00> : vector<128xf32>
    %423 = vector.multi_reduction <add>, %422, %cst_147 [0] : vector<8x128xf32> to vector<128xf32>
    %424 = vector.shape_cast %423 : vector<128xf32> to vector<1x128xf32>
    %425 = math.log %424 : vector<1x128xf32>
    %426 = vector.broadcast %425 : vector<1x128xf32> to vector<8x128xf32>
    %427 = arith.subf %421, %426 : vector<8x128xf32>
    %428 = math.exp %427 : vector<8x128xf32>
    %c4_i32_148 = arith.constant 4 : i32
    %429 = tpu.dynamic_rotate %428 by %c4_i32_148 dim 1 : vector<8x128xf32>, i32 -> vector<8x128xf32>
    %c124_i32_149 = arith.constant 124 : i32
    %430 = tpu.dynamic_rotate %428 by %c124_i32_149 dim 1 : vector<8x128xf32>, i32 -> vector<8x128xf32>
    %431 = arith.select %69, %429, %430 : vector<8x128xi1>, vector<8x128xf32>
    %432 = arith.addf %428, %431 : vector<8x128xf32>
    %c2_i32_150 = arith.constant 2 : i32
    %433 = tpu.dynamic_rotate %432 by %c2_i32_150 dim 1 : vector<8x128xf32>, i32 -> vector<8x128xf32>
    %c126_i32_151 = arith.constant 126 : i32
    %434 = tpu.dynamic_rotate %432 by %c126_i32_151 dim 1 : vector<8x128xf32>, i32 -> vector<8x128xf32>
    %435 = arith.select %94, %433, %434 : vector<8x128xi1>, vector<8x128xf32>
    %436 = arith.addf %432, %435 : vector<8x128xf32>
    %c1_i32_152 = arith.constant 1 : i32
    %437 = tpu.dynamic_rotate %436 by %c1_i32_152 dim 1 : vector<8x128xf32>, i32 -> vector<8x128xf32>
    %c127_i32_153 = arith.constant 127 : i32
    %438 = tpu.dynamic_rotate %436 by %c127_i32_153 dim 1 : vector<8x128xf32>, i32 -> vector<8x128xf32>
    %439 = arith.select %119, %437, %438 : vector<8x128xi1>, vector<8x128xf32>
    %440 = arith.addf %436, %439 : vector<8x128xf32>
    %441 = math.log %440 : vector<8x128xf32>
    %442 = arith.subf %427, %441 : vector<8x128xf32>
    %443 = math.exp %442 : vector<8x128xf32>
    %cst_154 = arith.constant dense<0.000000e+00> : vector<128xf32>
    %444 = vector.multi_reduction <add>, %443, %cst_154 [0] : vector<8x128xf32> to vector<128xf32>
    %445 = vector.shape_cast %444 : vector<128xf32> to vector<1x128xf32>
    %446 = math.log %445 : vector<1x128xf32>
    %447 = vector.broadcast %446 : vector<1x128xf32> to vector<8x128xf32>
    %448 = arith.subf %442, %447 : vector<8x128xf32>
    %449 = math.exp %448 : vector<8x128xf32>
    %c4_i32_155 = arith.constant 4 : i32
    %450 = tpu.dynamic_rotate %449 by %c4_i32_155 dim 1 : vector<8x128xf32>, i32 -> vector<8x128xf32>
    %c124_i32_156 = arith.constant 124 : i32
    %451 = tpu.dynamic_rotate %449 by %c124_i32_156 dim 1 : vector<8x128xf32>, i32 -> vector<8x128xf32>
    %452 = arith.select %69, %450, %451 : vector<8x128xi1>, vector<8x128xf32>
    %453 = arith.addf %449, %452 : vector<8x128xf32>
    %c2_i32_157 = arith.constant 2 : i32
    %454 = tpu.dynamic_rotate %453 by %c2_i32_157 dim 1 : vector<8x128xf32>, i32 -> vector<8x128xf32>
    %c126_i32_158 = arith.constant 126 : i32
    %455 = tpu.dynamic_rotate %453 by %c126_i32_158 dim 1 : vector<8x128xf32>, i32 -> vector<8x128xf32>
    %456 = arith.select %94, %454, %455 : vector<8x128xi1>, vector<8x128xf32>
    %457 = arith.addf %453, %456 : vector<8x128xf32>
    %c1_i32_159 = arith.constant 1 : i32
    %458 = tpu.dynamic_rotate %457 by %c1_i32_159 dim 1 : vector<8x128xf32>, i32 -> vector<8x128xf32>
    %c127_i32_160 = arith.constant 127 : i32
    %459 = tpu.dynamic_rotate %457 by %c127_i32_160 dim 1 : vector<8x128xf32>, i32 -> vector<8x128xf32>
    %460 = arith.select %119, %458, %459 : vector<8x128xi1>, vector<8x128xf32>
    %461 = arith.addf %457, %460 : vector<8x128xf32>
    %462 = math.log %461 : vector<8x128xf32>
    %463 = arith.subf %448, %462 : vector<8x128xf32>
    %464 = math.exp %463 : vector<8x128xf32>
    %cst_161 = arith.constant dense<0.000000e+00> : vector<128xf32>
    %465 = vector.multi_reduction <add>, %464, %cst_161 [0] : vector<8x128xf32> to vector<128xf32>
    %466 = vector.shape_cast %465 : vector<128xf32> to vector<1x128xf32>
    %467 = math.log %466 : vector<1x128xf32>
    %468 = vector.broadcast %467 : vector<1x128xf32> to vector<8x128xf32>
    %469 = arith.subf %463, %468 : vector<8x128xf32>
    %470 = math.exp %469 : vector<8x128xf32>
    %c4_i32_162 = arith.constant 4 : i32
    %471 = tpu.dynamic_rotate %470 by %c4_i32_162 dim 1 : vector<8x128xf32>, i32 -> vector<8x128xf32>
    %c124_i32_163 = arith.constant 124 : i32
    %472 = tpu.dynamic_rotate %470 by %c124_i32_163 dim 1 : vector<8x128xf32>, i32 -> vector<8x128xf32>
    %473 = arith.select %69, %471, %472 : vector<8x128xi1>, vector<8x128xf32>
    %474 = arith.addf %470, %473 : vector<8x128xf32>
    %c2_i32_164 = arith.constant 2 : i32
    %475 = tpu.dynamic_rotate %474 by %c2_i32_164 dim 1 : vector<8x128xf32>, i32 -> vector<8x128xf32>
    %c126_i32_165 = arith.constant 126 : i32
    %476 = tpu.dynamic_rotate %474 by %c126_i32_165 dim 1 : vector<8x128xf32>, i32 -> vector<8x128xf32>
    %477 = arith.select %94, %475, %476 : vector<8x128xi1>, vector<8x128xf32>
    %478 = arith.addf %474, %477 : vector<8x128xf32>
    %c1_i32_166 = arith.constant 1 : i32
    %479 = tpu.dynamic_rotate %478 by %c1_i32_166 dim 1 : vector<8x128xf32>, i32 -> vector<8x128xf32>
    %c127_i32_167 = arith.constant 127 : i32
    %480 = tpu.dynamic_rotate %478 by %c127_i32_167 dim 1 : vector<8x128xf32>, i32 -> vector<8x128xf32>
    %481 = arith.select %119, %479, %480 : vector<8x128xi1>, vector<8x128xf32>
    %482 = arith.addf %478, %481 : vector<8x128xf32>
    %483 = math.log %482 : vector<8x128xf32>
    %484 = arith.subf %469, %483 : vector<8x128xf32>
    %485 = math.exp %484 : vector<8x128xf32>
    %cst_168 = arith.constant dense<0.000000e+00> : vector<128xf32>
    %486 = vector.multi_reduction <add>, %485, %cst_168 [0] : vector<8x128xf32> to vector<128xf32>
    %487 = vector.shape_cast %486 : vector<128xf32> to vector<1x128xf32>
    %488 = math.log %487 : vector<1x128xf32>
    %489 = vector.broadcast %488 : vector<1x128xf32> to vector<8x128xf32>
    %490 = arith.subf %484, %489 : vector<8x128xf32>
    %491 = math.exp %490 : vector<8x128xf32>
    %c4_i32_169 = arith.constant 4 : i32
    %492 = tpu.dynamic_rotate %491 by %c4_i32_169 dim 1 : vector<8x128xf32>, i32 -> vector<8x128xf32>
    %c124_i32_170 = arith.constant 124 : i32
    %493 = tpu.dynamic_rotate %491 by %c124_i32_170 dim 1 : vector<8x128xf32>, i32 -> vector<8x128xf32>
    %494 = arith.select %69, %492, %493 : vector<8x128xi1>, vector<8x128xf32>
    %495 = arith.addf %491, %494 : vector<8x128xf32>
    %c2_i32_171 = arith.constant 2 : i32
    %496 = tpu.dynamic_rotate %495 by %c2_i32_171 dim 1 : vector<8x128xf32>, i32 -> vector<8x128xf32>
    %c126_i32_172 = arith.constant 126 : i32
    %497 = tpu.dynamic_rotate %495 by %c126_i32_172 dim 1 : vector<8x128xf32>, i32 -> vector<8x128xf32>
    %498 = arith.select %94, %496, %497 : vector<8x128xi1>, vector<8x128xf32>
    %499 = arith.addf %495, %498 : vector<8x128xf32>
    %c1_i32_173 = arith.constant 1 : i32
    %500 = tpu.dynamic_rotate %499 by %c1_i32_173 dim 1 : vector<8x128xf32>, i32 -> vector<8x128xf32>
    %c127_i32_174 = arith.constant 127 : i32
    %501 = tpu.dynamic_rotate %499 by %c127_i32_174 dim 1 : vector<8x128xf32>, i32 -> vector<8x128xf32>
    %502 = arith.select %119, %500, %501 : vector<8x128xi1>, vector<8x128xf32>
    %503 = arith.addf %499, %502 : vector<8x128xf32>
    %504 = math.log %503 : vector<8x128xf32>
    %505 = arith.subf %490, %504 : vector<8x128xf32>
    %506 = math.exp %505 : vector<8x128xf32>
    %cst_175 = arith.constant dense<0.000000e+00> : vector<128xf32>
    %507 = vector.multi_reduction <add>, %506, %cst_175 [0] : vector<8x128xf32> to vector<128xf32>
    %508 = vector.shape_cast %507 : vector<128xf32> to vector<1x128xf32>
    %509 = math.log %508 : vector<1x128xf32>
    %510 = vector.broadcast %509 : vector<1x128xf32> to vector<8x128xf32>
    %511 = arith.subf %505, %510 : vector<8x128xf32>
    %512 = math.exp %511 : vector<8x128xf32>
    %c4_i32_176 = arith.constant 4 : i32
    %513 = tpu.dynamic_rotate %512 by %c4_i32_176 dim 1 : vector<8x128xf32>, i32 -> vector<8x128xf32>
    %c124_i32_177 = arith.constant 124 : i32
    %514 = tpu.dynamic_rotate %512 by %c124_i32_177 dim 1 : vector<8x128xf32>, i32 -> vector<8x128xf32>
    %515 = arith.select %69, %513, %514 : vector<8x128xi1>, vector<8x128xf32>
    %516 = arith.addf %512, %515 : vector<8x128xf32>
    %c2_i32_178 = arith.constant 2 : i32
    %517 = tpu.dynamic_rotate %516 by %c2_i32_178 dim 1 : vector<8x128xf32>, i32 -> vector<8x128xf32>
    %c126_i32_179 = arith.constant 126 : i32
    %518 = tpu.dynamic_rotate %516 by %c126_i32_179 dim 1 : vector<8x128xf32>, i32 -> vector<8x128xf32>
    %519 = arith.select %94, %517, %518 : vector<8x128xi1>, vector<8x128xf32>
    %520 = arith.addf %516, %519 : vector<8x128xf32>
    %c1_i32_180 = arith.constant 1 : i32
    %521 = tpu.dynamic_rotate %520 by %c1_i32_180 dim 1 : vector<8x128xf32>, i32 -> vector<8x128xf32>
    %c127_i32_181 = arith.constant 127 : i32
    %522 = tpu.dynamic_rotate %520 by %c127_i32_181 dim 1 : vector<8x128xf32>, i32 -> vector<8x128xf32>
    %523 = arith.select %119, %521, %522 : vector<8x128xi1>, vector<8x128xf32>
    %524 = arith.addf %520, %523 : vector<8x128xf32>
    %525 = math.log %524 : vector<8x128xf32>
    %526 = arith.subf %511, %525 : vector<8x128xf32>
    %527 = math.exp %526 : vector<8x128xf32>
    %cst_182 = arith.constant dense<0.000000e+00> : vector<128xf32>
    %528 = vector.multi_reduction <add>, %527, %cst_182 [0] : vector<8x128xf32> to vector<128xf32>
    %529 = vector.shape_cast %528 : vector<128xf32> to vector<1x128xf32>
    %530 = math.log %529 : vector<1x128xf32>
    %531 = vector.broadcast %530 : vector<1x128xf32> to vector<8x128xf32>
    %532 = arith.subf %526, %531 : vector<8x128xf32>
    %533 = math.exp %532 : vector<8x128xf32>
    %c4_i32_183 = arith.constant 4 : i32
    %534 = tpu.dynamic_rotate %533 by %c4_i32_183 dim 1 : vector<8x128xf32>, i32 -> vector<8x128xf32>
    %c124_i32_184 = arith.constant 124 : i32
    %535 = tpu.dynamic_rotate %533 by %c124_i32_184 dim 1 : vector<8x128xf32>, i32 -> vector<8x128xf32>
    %536 = arith.select %69, %534, %535 : vector<8x128xi1>, vector<8x128xf32>
    %537 = arith.addf %533, %536 : vector<8x128xf32>
    %c2_i32_185 = arith.constant 2 : i32
    %538 = tpu.dynamic_rotate %537 by %c2_i32_185 dim 1 : vector<8x128xf32>, i32 -> vector<8x128xf32>
    %c126_i32_186 = arith.constant 126 : i32
    %539 = tpu.dynamic_rotate %537 by %c126_i32_186 dim 1 : vector<8x128xf32>, i32 -> vector<8x128xf32>
    %540 = arith.select %94, %538, %539 : vector<8x128xi1>, vector<8x128xf32>
    %541 = arith.addf %537, %540 : vector<8x128xf32>
    %c1_i32_187 = arith.constant 1 : i32
    %542 = tpu.dynamic_rotate %541 by %c1_i32_187 dim 1 : vector<8x128xf32>, i32 -> vector<8x128xf32>
    %c127_i32_188 = arith.constant 127 : i32
    %543 = tpu.dynamic_rotate %541 by %c127_i32_188 dim 1 : vector<8x128xf32>, i32 -> vector<8x128xf32>
    %544 = arith.select %119, %542, %543 : vector<8x128xi1>, vector<8x128xf32>
    %545 = arith.addf %541, %544 : vector<8x128xf32>
    %546 = math.log %545 : vector<8x128xf32>
    %547 = arith.subf %532, %546 : vector<8x128xf32>
    %548 = math.exp %547 : vector<8x128xf32>
    %cst_189 = arith.constant dense<0.000000e+00> : vector<128xf32>
    %549 = vector.multi_reduction <add>, %548, %cst_189 [0] : vector<8x128xf32> to vector<128xf32>
    %550 = vector.shape_cast %549 : vector<128xf32> to vector<1x128xf32>
    %551 = math.log %550 : vector<1x128xf32>
    %552 = vector.broadcast %551 : vector<1x128xf32> to vector<8x128xf32>
    %553 = arith.subf %547, %552 : vector<8x128xf32>
    %554 = math.exp %553 : vector<8x128xf32>
    %c0_190 = arith.constant 0 : index
    %c0_191 = arith.constant 0 : index
    %555 = vector.load %arg6[%c0_190, %c0_191] : memref<8x128xf32, #tpu.memory_space<vmem>>, vector<8x128xf32>
    tpu.vector_store %arg6[%c0_190, %c0_191], %554 {strides = array<i32>} : memref<8x128xf32, #tpu.memory_space<vmem>>, vector<8x128xf32>,
    return
  }
}

</mosaic_0001>

<llo_original>
// kernel: sinkhorn_net_forward.1
$region0: #{sinkhorn_net_forward.1}
  #allocation0 [shape = 'u32[]', space=smem, size = 0x4, offset = 0x4, fixed_abs, tag = 'smem constant byte address 0x4 - core index']
  #allocation1 [shape = 'u32[144,128]{1,0:T(1,128)}', space=vmem, size = 0x12000, scoped, tag = 'internal scratch']
  %s0 = inlined_call_operand.vmem [shape: f32[8,128], index: 0, kind: input, shape index: {}]
  %s1 = inlined_call_operand.vmem [shape: f32[128,32], index: 1, kind: input, shape index: {}]
  %s2 = inlined_call_operand.vmem [shape: f32[32,128], index: 2, kind: input, shape index: {}]
  %s3 = inlined_call_operand.vmem [shape: f32[8,128], index: 3, kind: input, shape index: {}]
  %s4 = inlined_call_operand.vmem [shape: f32[8,128], index: 4, kind: input, shape index: {}]
  %s5 = inlined_call_operand.vmem [shape: f32[8,128], index: 5, kind: output, shape index: {0}]
  %s6 = inlined_call_operand.vmem [shape: f32[8,128], index: 6, kind: output, shape index: {1}]
  %7 = xla_tuple %s5, %s6
  %s8 = sld [smem:[#allocation0]]
  $region38: #{sinkhorn_net_forward.1} parent=0
    _
  %s10 = ssub.s32 1, %s8
  %s11 = scalar_select 0, %s10, %s8
  // Predicated region
  $region2: #{sinkhorn_net_forward.1} parent=0 // pred_check
    _
  $region3: #{sinkhorn_net_forward.1} parent=0 // pred_check_branch
    %13 = sbr.rel (0) target = $region5
  $region4: #{sinkhorn_net_forward.1} parent=0 // pred_region
    _
  $region5: #{sinkhorn_net_forward.1} parent=0 // pred_fallthru
    _
  // Predicated region
  $region6: #{sinkhorn_net_forward.1} parent=0 // pred_check
    _
  $region7: #{sinkhorn_net_forward.1} parent=0 // pred_check_branch
    %15 = sbr.rel (0) target = $region9
  $region8: #{sinkhorn_net_forward.1} parent=0 // pred_region
    _
  $region9: #{sinkhorn_net_forward.1} parent=0 // pred_fallthru
    _
  // Predicated region
  $region10: #{sinkhorn_net_forward.1} parent=0 // pred_check
    _
  $region11: #{sinkhorn_net_forward.1} parent=0 // pred_check_branch
    %17 = sbr.rel (0) target = $region13
  $region12: #{sinkhorn_net_forward.1} parent=0 // pred_region
    _
  $region13: #{sinkhorn_net_forward.1} parent=0 // pred_fallthru
    _
  // Predicated region
  $region14: #{sinkhorn_net_forward.1} parent=0 // pred_check
    _
  $region15: #{sinkhorn_net_forward.1} parent=0 // pred_check_branch
    %19 = sbr.rel (0) target = $region17
  $region16: #{sinkhorn_net_forward.1} parent=0 // pred_region
    _
  $region17: #{sinkhorn_net_forward.1} parent=0 // pred_fallthru
    _
  // Predicated region
  $region18: #{sinkhorn_net_forward.1} parent=0 // pred_check
    _
  $region19: #{sinkhorn_net_forward.1} parent=0 // pred_check_branch
    %21 = sbr.rel (0) target = $region21
  $region20: #{sinkhorn_net_forward.1} parent=0 // pred_region
    _
  $region21: #{sinkhorn_net_forward.1} parent=0 // pred_fallthru
    _
  %v22 = vld [vmem:[%s3] sm:$0x1]
  %v23 = vld [vmem:[%s3 + $0x1] sm:$0x1]
  %v24 = vld [vmem:[%s0] sm:$0xff]
  %v25 = vld [vmem:[%s1] sm:$0xff]
  %v26 = vld [vmem:[%s1 + $0x8] sm:$0xff]
  %v27 = vld [vmem:[%s1 + $0x10] sm:$0xff]
  %v28 = vld [vmem:[%s1 + $0x18] sm:$0xff]
  %v29 = vld [vmem:[%s1 + $0x20] sm:$0xff]
  %v30 = vld [vmem:[%s1 + $0x28] sm:$0xff]
  %v31 = vld [vmem:[%s1 + $0x30] sm:$0xff]
  %v32 = vld [vmem:[%s1 + $0x38] sm:$0xff]
  %v33 = vld [vmem:[%s1 + $0x40] sm:$0xff]
  %v34 = vld [vmem:[%s1 + $0x48] sm:$0xff]
  %v35 = vld [vmem:[%s1 + $0x50] sm:$0xff]
  %v36 = vld [vmem:[%s1 + $0x58] sm:$0xff]
  %v37 = vld [vmem:[%s1 + $0x60] sm:$0xff]
  %v38 = vld [vmem:[%s1 + $0x68] sm:$0xff]
  %v39 = vld [vmem:[%s1 + $0x70] sm:$0xff]
  %v40 = vld [vmem:[%s1 + $0x78] sm:$0xff]
  %v41 = vlaneseq
  %v42 = vshrl.u32 %v41, 7
  %v43 = vsub.s32 0, %v42
  %v44 = vrot.slane %v22, %v43
  %45 = vmatprep.subr.mxu0 0.0
  %46 = vmatpush1.msra.mxu0 %v40
  %47 = vmatprep.subr.mxu0 0.0
  %48 = vmatpush1.msra.mxu0 %v39
  %49 = vmatprep.subr.mxu0 0.0
  %50 = vmatpush1.msra.mxu0 %v38
  %51 = vmatprep.subr.mxu0 0.0
  %52 = vmatpush1.msra.mxu0 %v37
  %53 = vmatprep.subr.mxu0 0.0
  %54 = vmatpush1.msra.mxu0 %v36
  %55 = vmatprep.subr.mxu0 0.0
  %56 = vmatpush1.msra.mxu0 %v35
  %57 = vmatprep.subr.mxu0 0.0
  %58 = vmatpush1.msra.mxu0 %v34
  %59 = vmatprep.subr.mxu0 0.0
  %60 = vmatpush1.msra.mxu0 %v33
  %61 = vmatprep.subr.mxu0 0.0
  %62 = vmatpush1.msra.mxu0 %v32
  %63 = vmatprep.subr.mxu0 0.0
  %64 = vmatpush1.msra.mxu0 %v31
  %65 = vmatprep.subr.mxu0 0.0
  %66 = vmatpush1.msra.mxu0 %v30
  %67 = vmatprep.subr.mxu0 0.0
  %68 = vmatpush1.msra.mxu0 %v29
  %69 = vmatprep.subr.mxu0 0.0
  %70 = vmatpush1.msra.mxu0 %v28
  %71 = vmatprep.subr.mxu0 0.0
  %72 = vmatpush1.msra.mxu0 %v27
  %73 = vmatprep.subr.mxu0 0.0
  %74 = vmatpush1.msra.mxu0 %v26
  %75 = vmatprep.subr.mxu0 0.0
  %76 = vmatpush1.msra.mxu0 %v25
  %77 = vmatprep.subr.mxu0 0.0
  %78 = vmatpush2.msra.mxu0 0.0
  %79 = vmatprep.subr.mxu0 0.0
  %80 = vmatpush2.msra.mxu0 0.0
  %81 = vmatprep.subr.mxu0 0.0
  %82 = vmatpush2.msra.mxu0 0.0
  %83 = vmatprep.subr.mxu0 0.0
  %84 = vmatpush2.msra.mxu0 0.0
  %85 = vmatprep.subr.mxu0 0.0
  %86 = vmatpush2.msra.mxu0 0.0
  %87 = vmatprep.subr.mxu0 0.0
  %88 = vmatpush2.msra.mxu0 0.0
  %89 = vmatprep.subr.mxu0 0.0
  %90 = vmatpush2.msra.mxu0 0.0
  %91 = vmatprep.subr.mxu0 0.0
  %92 = vmatpush2.msra.mxu0 0.0
  %93 = vmatprep.subr.mxu0 0.0
  %94 = vmatpush2.msra.mxu0 0.0
  %95 = vmatprep.subr.mxu0 0.0
  %96 = vmatpush2.msra.mxu0 0.0
  %97 = vmatprep.subr.mxu0 0.0
  %98 = vmatpush2.msra.mxu0 0.0
  %99 = vmatprep.subr.mxu0 0.0
  %100 = vmatpush2.msra.mxu0 0.0
  %101 = vmatprep.subr.mxu0 0.0
  %102 = vmatpush2.msra.mxu0 0.0
  %103 = vmatprep.subr.mxu0 0.0
  %104 = vmatpush2.msra.mxu0 0.0
  %105 = vmatprep.subr.mxu0 0.0
  %106 = vmatpush2.msra.mxu0 0.0
  %107 = vmatprep.subr.mxu0 0.0
  %108 = vmatpush2.msra.mxu0 0.0
  %109 = vmatprep.mubr.f32.mxu0 0.0
  %110 = vmatmul.mubr.f32.gmra.mxu0 %v24
  %v111 = vpop.f32.mrf.mxu0
  %v112 = vadd.f32 %v44, %v111
  %v113 = vpop.f32.mrf.mxu0
  %114 = vdwg.mxu0
  %v115 = vmax.f32 %v112, 0.0
  %v116 = vld [vmem:[%s2] sm:$0xff]
  %v117 = vld [vmem:[%s2 + $0x8] sm:$0xff]
  %v118 = vld [vmem:[%s2 + $0x10] sm:$0xff]
  %v119 = vld [vmem:[%s2 + $0x18] sm:$0xff]
  %v120 = vlaneseq
  %v121 = vshrl.u32 %v120, 7
  %v122 = vsub.s32 0, %v121
  %v123 = vrot.slane %v23, %v122
  %vm124 = vcmask 261120
  %v126 = vsel %vm124, %v115, 0
  %128 = vmatprep.subr.mxu0 0.0
  %129 = vmatpush1.msra.mxu0 0.0
  %130 = vmatprep.subr.mxu0 0.0
  %131 = vmatpush1.msra.mxu0 0.0
  %132 = vmatprep.subr.mxu0 0.0
  %133 = vmatpush1.msra.mxu0 0.0
  %134 = vmatprep.subr.mxu0 0.0
  %135 = vmatpush1.msra.mxu0 0.0
  %136 = vmatprep.subr.mxu0 0.0
  %137 = vmatpush1.msra.mxu0 0.0
  %138 = vmatprep.subr.mxu0 0.0
  %139 = vmatpush1.msra.mxu0 0.0
  %140 = vmatprep.subr.mxu0 0.0
  %141 = vmatpush1.msra.mxu0 0.0
  %142 = vmatprep.subr.mxu0 0.0
  %143 = vmatpush1.msra.mxu0 0.0
  %144 = vmatprep.subr.mxu0 0.0
  %145 = vmatpush1.msra.mxu0 0.0
  %146 = vmatprep.subr.mxu0 0.0
  %147 = vmatpush1.msra.mxu0 0.0
  %148 = vmatprep.subr.mxu0 0.0
  %149 = vmatpush1.msra.mxu0 0.0
  %150 = vmatprep.subr.mxu0 0.0
  %151 = vmatpush1.msra.mxu0 0.0
  %152 = vmatprep.subr.mxu0 0.0
  %153 = vmatpush1.msra.mxu0 %v119
  %154 = vmatprep.subr.mxu0 0.0
  %155 = vmatpush1.msra.mxu0 %v118
  %156 = vmatprep.subr.mxu0 0.0
  %157 = vmatpush1.msra.mxu0 %v117
  %158 = vmatprep.subr.mxu0 0.0
  %159 = vmatpush1.msra.mxu0 %v116
  %160 = vmatprep.subr.mxu0 0.0
  %161 = vmatpush2.msra.mxu0 0.0
  %162 = vmatprep.subr.mxu0 0.0
  %163 = vmatpush2.msra.mxu0 0.0
  %164 = vmatprep.subr.mxu0 0.0
  %165 = vmatpush2.msra.mxu0 0.0
  %166 = vmatprep.subr.mxu0 0.0
  %167 = vmatpush2.msra.mxu0 0.0
  %168 = vmatprep.subr.mxu0 0.0
  %169 = vmatpush2.msra.mxu0 0.0
  %170 = vmatprep.subr.mxu0 0.0
  %171 = vmatpush2.msra.mxu0 0.0
  %172 = vmatprep.subr.mxu0 0.0
  %173 = vmatpush2.msra.mxu0 0.0
  %174 = vmatprep.subr.mxu0 0.0
  %175 = vmatpush2.msra.mxu0 0.0
  %176 = vmatprep.subr.mxu0 0.0
  %177 = vmatpush2.msra.mxu0 0.0
  %178 = vmatprep.subr.mxu0 0.0
  %179 = vmatpush2.msra.mxu0 0.0
  %180 = vmatprep.subr.mxu0 0.0
  %181 = vmatpush2.msra.mxu0 0.0
  %182 = vmatprep.subr.mxu0 0.0
  %183 = vmatpush2.msra.mxu0 0.0
  %184 = vmatprep.subr.mxu0 0.0
  %185 = vmatpush2.msra.mxu0 0.0
  %186 = vmatprep.subr.mxu0 0.0
  %187 = vmatpush2.msra.mxu0 0.0
  %188 = vmatprep.subr.mxu0 0.0
  %189 = vmatpush2.msra.mxu0 0.0
  %190 = vmatprep.subr.mxu0 0.0
  %191 = vmatpush2.msra.mxu0 0.0
  %192 = vmatprep.mubr.f32.mxu0 0.0
  %193 = vmatmul.mubr.f32.gmra.mxu0 %v126
  %v194 = vpop.f32.mrf.mxu0
  %v195 = vadd.f32 %v123, %v194
  %v196 = vpop.f32.mrf.mxu0
  %197 = vdwg.mxu0
  %198 = vst [vmem:[%s5] sm:$0xff] %v195
  %v199 = vrot.slane %v195, 4
  %v200 = vmax.f32 %v195, %v199
  %v201 = vrot.slane %v200, 2
  %v202 = vmax.f32 %v200, %v201
  %v203 = vrot.slane %v202, 1
  %v204 = vmax.f32 %v202, %v203
  %v205 = vsub.f32 %v195, %v204
  %v206 = vmul.f32 %v205, 1.442695
  %v207 = vpow.pop %v206
  %v208 = vrot.slane %v207, 4
  %v209 = vadd.f32 %v207, %v208
  %v210 = vrot.slane %v209, 2
  %v211 = vadd.f32 %v209, %v210
  %v212 = vrot.slane %v211, 1
  %v213 = vadd.f32 %v211, %v212
  %v214 = vlog2.pop %v213
  %v215 = vmul.f32 %v214, 0.6931472
  %v216 = vadd.f32 %v204, %v215
  %v217 = vsub.f32 %v195, %v216
  %v218 = vld [vmem:[%s4] sm:$0xff]
  %v219 = vadd.f32 %v217, %v218
  %v220 = vlaneseq
  %v221 = vand.u32 %v220, 127
  %v222 = vcvt.s32.f32 %v221
  %vm223 = vcmp.lt.s32.totalorder %v221, 0
  %v224 = vsub.s32 0, %v221
  %v225 = vsel %vm223, %v224, %v221
  %v226 = vshrl.u32 %v225, 3
  %v227 = vand.u32 %v225, 7
  %v228 = vsub.s32 0, %v227
  %v229 = vsel %vm223, %v228, %v227
  %vm230 = vcmp.ne.s32.totalorder %v229, 0
  %vm231 = vcmp.lt.s32.totalorder %v229, 0
  %vm232 = vmand %vm231, %vm230
  %v233 = vadd.s32 %v229, 8
  %v234 = vsel %vm232, %v233, %v229
  %vm235 = vcmp.lt.s32.totalorder %v234, 0
  %v236 = vsub.s32 0, %v234
  %v237 = vsel %vm235, %v236, %v234
  %v238 = vshrl.u32 %v237, 3
  %v239 = vand.u32 %v237, 7
  %v240 = vsub.s32 0, %v239
  %v241 = vsel %vm235, %v240, %v239
  %vm242 = vcmp.ne.s32.totalorder %v241, 0
  %vm243 = vcmp.lt.s32.totalorder %v241, 0
  %vm244 = vmand %vm243, %vm242
  %v245 = vadd.s32 %v241, 8
  %v246 = vsel %vm244, %v245, %v241
  %vm247 = vcmp.lt.s32.totalorder %v246, 4
  %v248 = vadd.f32 %v222, 4.0
  %v249 = vsub.f32 %v222, 4.0
  %v250 = vsel %vm247, %v248, %v249
  %251 = vrot.lane.b32.xlu0 %v222, 4
  %v252 = vpop.permute.xlu0 %251
  %vm253 = vcmp.eq.f32.partialorder %v252, %v250
  %vm254 = vcmp.lt.s32.totalorder %v234, 0
  %v255 = vsub.s32 0, %v234
  %v256 = vsel %vm254, %v255, %v234
  %v257 = vshrl.u32 %v256, 2
  %v258 = vand.u32 %v256, 3
  %v259 = vsub.s32 0, %v258
  %v260 = vsel %vm254, %v259, %v258
  %vm261 = vcmp.ne.s32.totalorder %v260, 0
  %vm262 = vcmp.lt.s32.totalorder %v260, 0
  %vm263 = vmand %vm262, %vm261
  %v264 = vadd.s32 %v260, 4
  %v265 = vsel %vm263, %v264, %v260
  %vm266 = vcmp.lt.s32.totalorder %v265, 2
  %v267 = vadd.f32 %v222, 2.0
  %v268 = vsub.f32 %v222, 2.0
  %v269 = vsel %vm266, %v267, %v268
  %270 = vrot.lane.b32.xlu0 %v222, 2
  %v271 = vpop.permute.xlu0 %270
  %vm272 = vcmp.eq.f32.partialorder %v271, %v269
  %vm273 = vcmp.lt.s32.totalorder %v234, 0
  %v274 = vsub.s32 0, %v234
  %v275 = vsel %vm273, %v274, %v234
  %v276 = vshrl.u32 %v275, 1
  %v277 = vand.u32 %v275, 1
  %v278 = vsub.s32 0, %v277
  %v279 = vsel %vm273, %v278, %v277
  %vm280 = vcmp.ne.s32.totalorder %v279, 0
  %vm281 = vcmp.lt.s32.totalorder %v279, 0
  %vm282 = vmand %vm281, %vm280
  %v283 = vadd.s32 %v279, 2
  %v284 = vsel %vm282, %v283, %v279
  %vm285 = vcmp.lt.s32.totalorder %v284, 1
  %v286 = vadd.f32 %v222, 1.0
  %v287 = vsub.f32 %v222, 1.0
  %v288 = vsel %vm285, %v286, %v287
  %289 = vrot.lane.b32.xlu0 %v222, 1
  %v290 = vpop.permute.xlu0 %289
  %vm291 = vcmp.eq.f32.partialorder %v290, %v288
  %292 = vrot.lane.b32.xlu0 %v219, 4
  %v293 = vpop.permute.xlu0 %292
  %294 = vrot.lane.b32.xlu0 %v219, 124
  %v295 = vpop.permute.xlu0 %294
  %v296 = vsel %vm253, %v293, %v295
  %v297 = vmax.f32 %v219, %v296
  %298 = vrot.lane.b32.xlu0 %v297, 2
  %v299 = vpop.permute.xlu0 %298
  %300 = vrot.lane.b32.xlu0 %v297, 126
  %v301 = vpop.permute.xlu0 %300
  %v302 = vsel %vm272, %v299, %v301
  %v303 = vmax.f32 %v297, %v302
  %304 = vrot.lane.b32.xlu0 %v303, 1
  %v305 = vpop.permute.xlu0 %304
  %306 = vrot.lane.b32.xlu0 %v303, 127
  %v307 = vpop.permute.xlu0 %306
  %v308 = vsel %vm291, %v305, %v307
  %v309 = vmax.f32 %v303, %v308
  %v310 = vsub.f32 %v219, %v309
  %v311 = vmul.f32 %v310, 1.442695
  %v312 = vpow.pop %v311
  %313 = vrot.lane.b32.xlu0 %v312, 4
  %v314 = vpop.permute.xlu0 %313
  %315 = vrot.lane.b32.xlu0 %v312, 124
  %v316 = vpop.permute.xlu0 %315
  %v317 = vsel %vm253, %v314, %v316
  %v318 = vadd.f32 %v312, %v317
  %319 = vrot.lane.b32.xlu0 %v318, 2
  %v320 = vpop.permute.xlu0 %319
  %321 = vrot.lane.b32.xlu0 %v318, 126
  %v322 = vpop.permute.xlu0 %321
  %v323 = vsel %vm272, %v320, %v322
  %v324 = vadd.f32 %v318, %v323
  %325 = vrot.lane.b32.xlu0 %v324, 1
  %v326 = vpop.permute.xlu0 %325
  %327 = vrot.lane.b32.xlu0 %v324, 127
  %v328 = vpop.permute.xlu0 %327
  %v329 = vsel %vm291, %v326, %v328
  %v330 = vadd.f32 %v324, %v329
  %v331 = vlog2.pop %v330
  %v332 = vmul.f32 %v331, 0.6931472
  %v333 = vadd.f32 %v309, %v332
  %v334 = vsub.f32 %v219, %v333
  %v335 = vmul.f32 %v334, 1.442695
  %v336 = vpow.pop %v335
  %v337 = vrot.slane %v336, 4
  %v338 = vadd.f32 %v336, %v337
  %v339 = vrot.slane %v338, 2
  %v340 = vadd.f32 %v338, %v339
  %v341 = vrot.slane %v340, 1
  %v342 = vadd.f32 %v340, %v341
  %v343 = vlog2.pop %v342
  %v344 = vmul.f32 %v343, 0.6931472
  %v345 = vsub.f32 %v334, %v344
  %v346 = vmul.f32 %v345, 1.442695
  %v347 = vpow.pop %v346
  %348 = vrot.lane.b32.xlu0 %v347, 4
  %v349 = vpop.permute.xlu0 %348
  %350 = vrot.lane.b32.xlu0 %v347, 124
  %v351 = vpop.permute.xlu0 %350
  %v352 = vsel %vm253, %v349, %v351
  %v353 = vadd.f32 %v347, %v352
  %354 = vrot.lane.b32.xlu0 %v353, 2
  %v355 = vpop.permute.xlu0 %354
  %356 = vrot.lane.b32.xlu0 %v353, 126
  %v357 = vpop.permute.xlu0 %356
  %v358 = vsel %vm272, %v355, %v357
  %v359 = vadd.f32 %v353, %v358
  %360 = vrot.lane.b32.xlu0 %v359, 1
  %v361 = vpop.permute.xlu0 %360
  %362 = vrot.lane.b32.xlu0 %v359, 127
  %v363 = vpop.permute.xlu0 %362
  %v364 = vsel %vm291, %v361, %v363
  %v365 = vadd.f32 %v359, %v364
  %v366 = vlog2.pop %v365
  %v367 = vmul.f32 %v366, 0.6931472
  %v368 = vsub.f32 %v345, %v367
  %v369 = vmul.f32 %v368, 1.442695
  %v370 = vpow.pop %v369
  %v371 = vrot.slane %v370, 4
  %v372 = vadd.f32 %v370, %v371
  %v373 = vrot.slane %v372, 2
  %v374 = vadd.f32 %v372, %v373
  %v375 = vrot.slane %v374, 1
  %v376 = vadd.f32 %v374, %v375
  %v377 = vlog2.pop %v376
  %v378 = vmul.f32 %v377, 0.6931472
  %v379 = vsub.f32 %v368, %v378
  %v380 = vmul.f32 %v379, 1.442695
  %v381 = vpow.pop %v380
  %382 = vrot.lane.b32.xlu0 %v381, 4
  %v383 = vpop.permute.xlu0 %382
  %384 = vrot.lane.b32.xlu0 %v381, 124
  %v385 = vpop.permute.xlu0 %384
  %v386 = vsel %vm253, %v383, %v385
  %v387 = vadd.f32 %v381, %v386
  %388 = vrot.lane.b32.xlu0 %v387, 2
  %v389 = vpop.permute.xlu0 %388
  %390 = vrot.lane.b32.xlu0 %v387, 126
  %v391 = vpop.permute.xlu0 %390
  %v392 = vsel %vm272, %v389, %v391
  %v393 = vadd.f32 %v387, %v392
  %394 = vrot.lane.b32.xlu0 %v393, 1
  %v395 = vpop.permute.xlu0 %394
  %396 = vrot.lane.b32.xlu0 %v393, 127
  %v397 = vpop.permute.xlu0 %396
  %v398 = vsel %vm291, %v395, %v397
  %v399 = vadd.f32 %v393, %v398
  %v400 = vlog2.pop %v399
  %v401 = vmul.f32 %v400, 0.6931472
  %v402 = vsub.f32 %v379, %v401
  %v403 = vmul.f32 %v402, 1.442695
  %v404 = vpow.pop %v403
  %v405 = vrot.slane %v404, 4
  %v406 = vadd.f32 %v404, %v405
  %v407 = vrot.slane %v406, 2
  %v408 = vadd.f32 %v406, %v407
  %v409 = vrot.slane %v408, 1
  %v410 = vadd.f32 %v408, %v409
  %v411 = vlog2.pop %v410
  %v412 = vmul.f32 %v411, 0.6931472
  %v413 = vsub.f32 %v402, %v412
  %v414 = vmul.f32 %v413, 1.442695
  %v415 = vpow.pop %v414
  %416 = vrot.lane.b32.xlu0 %v415, 4
  %v417 = vpop.permute.xlu0 %416
  %418 = vrot.lane.b32.xlu0 %v415, 124
  %v419 = vpop.permute.xlu0 %418
  %v420 = vsel %vm253, %v417, %v419
  %v421 = vadd.f32 %v415, %v420
  %422 = vrot.lane.b32.xlu0 %v421, 2
  %v423 = vpop.permute.xlu0 %422
  %424 = vrot.lane.b32.xlu0 %v421, 126
  %v425 = vpop.permute.xlu0 %424
  %v426 = vsel %vm272, %v423, %v425
  %v427 = vadd.f32 %v421, %v426
  %428 = vrot.lane.b32.xlu0 %v427, 1
  %v429 = vpop.permute.xlu0 %428
  %430 = vrot.lane.b32.xlu0 %v427, 127
  %v431 = vpop.permute.xlu0 %430
  %v432 = vsel %vm291, %v429, %v431
  %v433 = vadd.f32 %v427, %v432
  %v434 = vlog2.pop %v433
  %v435 = vmul.f32 %v434, 0.6931472
  %v436 = vsub.f32 %v413, %v435
  %v437 = vmul.f32 %v436, 1.442695
  %v438 = vpow.pop %v437
  %v439 = vrot.slane %v438, 4
  %v440 = vadd.f32 %v438, %v439
  %v441 = vrot.slane %v440, 2
  %v442 = vadd.f32 %v440, %v441
  %v443 = vrot.slane %v442, 1
  %v444 = vadd.f32 %v442, %v443
  %v445 = vlog2.pop %v444
  %v446 = vmul.f32 %v445, 0.6931472
  %v447 = vsub.f32 %v436, %v446
  %v448 = vmul.f32 %v447, 1.442695
  %v449 = vpow.pop %v448
  %450 = vrot.lane.b32.xlu0 %v449, 4
  %v451 = vpop.permute.xlu0 %450
  %452 = vrot.lane.b32.xlu0 %v449, 124
  %v453 = vpop.permute.xlu0 %452
  %v454 = vsel %vm253, %v451, %v453
  %v455 = vadd.f32 %v449, %v454
  %456 = vrot.lane.b32.xlu0 %v455, 2
  %v457 = vpop.permute.xlu0 %456
  %458 = vrot.lane.b32.xlu0 %v455, 126
  %v459 = vpop.permute.xlu0 %458
  %v460 = vsel %vm272, %v457, %v459
  %v461 = vadd.f32 %v455, %v460
  %462 = vrot.lane.b32.xlu0 %v461, 1
  %v463 = vpop.permute.xlu0 %462
  %464 = vrot.lane.b32.xlu0 %v461, 127
  %v465 = vpop.permute.xlu0 %464
  %v466 = vsel %vm291, %v463, %v465
  %v467 = vadd.f32 %v461, %v466
  %v468 = vlog2.pop %v467
  %v469 = vmul.f32 %v468, 0.6931472
  %v470 = vsub.f32 %v447, %v469
  %v471 = vmul.f32 %v470, 1.442695
  %v472 = vpow.pop %v471
  %v473 = vrot.slane %v472, 4
  %v474 = vadd.f32 %v472, %v473
  %v475 = vrot.slane %v474, 2
  %v476 = vadd.f32 %v474, %v475
  %v477 = vrot.slane %v476, 1
  %v478 = vadd.f32 %v476, %v477
  %v479 = vlog2.pop %v478
  %v480 = vmul.f32 %v479, 0.6931472
  %v481 = vsub.f32 %v470, %v480
  %v482 = vmul.f32 %v481, 1.442695
  %v483 = vpow.pop %v482
  %484 = vrot.lane.b32.xlu0 %v483, 4
  %v485 = vpop.permute.xlu0 %484
  %486 = vrot.lane.b32.xlu0 %v483, 124
  %v487 = vpop.permute.xlu0 %486
  %v488 = vsel %vm253, %v485, %v487
  %v489 = vadd.f32 %v483, %v488
  %490 = vrot.lane.b32.xlu0 %v489, 2
  %v491 = vpop.permute.xlu0 %490
  %492 = vrot.lane.b32.xlu0 %v489, 126
  %v493 = vpop.permute.xlu0 %492
  %v494 = vsel %vm272, %v491, %v493
  %v495 = vadd.f32 %v489, %v494
  %496 = vrot.lane.b32.xlu0 %v495, 1
  %v497 = vpop.permute.xlu0 %496
  %498 = vrot.lane.b32.xlu0 %v495, 127
  %v499 = vpop.permute.xlu0 %498
  %v500 = vsel %vm291, %v497, %v499
  %v501 = vadd.f32 %v495, %v500
  %v502 = vlog2.pop %v501
  %v503 = vmul.f32 %v502, 0.6931472
  %v504 = vsub.f32 %v481, %v503
  %v505 = vmul.f32 %v504, 1.442695
  %v506 = vpow.pop %v505
  %v507 = vrot.slane %v506, 4
  %v508 = vadd.f32 %v506, %v507
  %v509 = vrot.slane %v508, 2
  %v510 = vadd.f32 %v508, %v509
  %v511 = vrot.slane %v510, 1
  %v512 = vadd.f32 %v510, %v511
  %v513 = vlog2.pop %v512
  %v514 = vmul.f32 %v513, 0.6931472
  %v515 = vsub.f32 %v504, %v514
  %v516 = vmul.f32 %v515, 1.442695
  %v517 = vpow.pop %v516
  %518 = vrot.lane.b32.xlu0 %v517, 4
  %v519 = vpop.permute.xlu0 %518
  %520 = vrot.lane.b32.xlu0 %v517, 124
  %v521 = vpop.permute.xlu0 %520
  %v522 = vsel %vm253, %v519, %v521
  %v523 = vadd.f32 %v517, %v522
  %524 = vrot.lane.b32.xlu0 %v523, 2
  %v525 = vpop.permute.xlu0 %524
  %526 = vrot.lane.b32.xlu0 %v523, 126
  %v527 = vpop.permute.xlu0 %526
  %v528 = vsel %vm272, %v525, %v527
  %v529 = vadd.f32 %v523, %v528
  %530 = vrot.lane.b32.xlu0 %v529, 1
  %v531 = vpop.permute.xlu0 %530
  %532 = vrot.lane.b32.xlu0 %v529, 127
  %v533 = vpop.permute.xlu0 %532
  %v534 = vsel %vm291, %v531, %v533
  %v535 = vadd.f32 %v529, %v534
  %v536 = vlog2.pop %v535
  %v537 = vmul.f32 %v536, 0.6931472
  %v538 = vsub.f32 %v515, %v537
  %v539 = vmul.f32 %v538, 1.442695
  %v540 = vpow.pop %v539
  %v541 = vrot.slane %v540, 4
  %v542 = vadd.f32 %v540, %v541
  %v543 = vrot.slane %v542, 2
  %v544 = vadd.f32 %v542, %v543
  %v545 = vrot.slane %v544, 1
  %v546 = vadd.f32 %v544, %v545
  %v547 = vlog2.pop %v546
  %v548 = vmul.f32 %v547, 0.6931472
  %v549 = vsub.f32 %v538, %v548
  %v550 = vmul.f32 %v549, 1.442695
  %v551 = vpow.pop %v550
  %552 = vrot.lane.b32.xlu0 %v551, 4
  %v553 = vpop.permute.xlu0 %552
  %554 = vrot.lane.b32.xlu0 %v551, 124
  %v555 = vpop.permute.xlu0 %554
  %v556 = vsel %vm253, %v553, %v555
  %v557 = vadd.f32 %v551, %v556
  %558 = vrot.lane.b32.xlu0 %v557, 2
  %v559 = vpop.permute.xlu0 %558
  %560 = vrot.lane.b32.xlu0 %v557, 126
  %v561 = vpop.permute.xlu0 %560
  %v562 = vsel %vm272, %v559, %v561
  %v563 = vadd.f32 %v557, %v562
  %564 = vrot.lane.b32.xlu0 %v563, 1
  %v565 = vpop.permute.xlu0 %564
  %566 = vrot.lane.b32.xlu0 %v563, 127
  %v567 = vpop.permute.xlu0 %566
  %v568 = vsel %vm291, %v565, %v567
  %v569 = vadd.f32 %v563, %v568
  %v570 = vlog2.pop %v569
  %v571 = vmul.f32 %v570, 0.6931472
  %v572 = vsub.f32 %v549, %v571
  %v573 = vmul.f32 %v572, 1.442695
  %v574 = vpow.pop %v573
  %v575 = vrot.slane %v574, 4
  %v576 = vadd.f32 %v574, %v575
  %v577 = vrot.slane %v576, 2
  %v578 = vadd.f32 %v576, %v577
  %v579 = vrot.slane %v578, 1
  %v580 = vadd.f32 %v578, %v579
  %v581 = vlog2.pop %v580
  %v582 = vmul.f32 %v581, 0.6931472
  %v583 = vsub.f32 %v572, %v582
  %v584 = vmul.f32 %v583, 1.442695
  %v585 = vpow.pop %v584
  %586 = vrot.lane.b32.xlu0 %v585, 4
  %v587 = vpop.permute.xlu0 %586
  %588 = vrot.lane.b32.xlu0 %v585, 124
  %v589 = vpop.permute.xlu0 %588
  %v590 = vsel %vm253, %v587, %v589
  %v591 = vadd.f32 %v585, %v590
  %592 = vrot.lane.b32.xlu0 %v591, 2
  %v593 = vpop.permute.xlu0 %592
  %594 = vrot.lane.b32.xlu0 %v591, 126
  %v595 = vpop.permute.xlu0 %594
  %v596 = vsel %vm272, %v593, %v595
  %v597 = vadd.f32 %v591, %v596
  %598 = vrot.lane.b32.xlu0 %v597, 1
  %v599 = vpop.permute.xlu0 %598
  %600 = vrot.lane.b32.xlu0 %v597, 127
  %v601 = vpop.permute.xlu0 %600
  %v602 = vsel %vm291, %v599, %v601
  %v603 = vadd.f32 %v597, %v602
  %v604 = vlog2.pop %v603
  %v605 = vmul.f32 %v604, 0.6931472
  %v606 = vsub.f32 %v583, %v605
  %v607 = vmul.f32 %v606, 1.442695
  %v608 = vpow.pop %v607
  %v609 = vrot.slane %v608, 4
  %v610 = vadd.f32 %v608, %v609
  %v611 = vrot.slane %v610, 2
  %v612 = vadd.f32 %v610, %v611
  %v613 = vrot.slane %v612, 1
  %v614 = vadd.f32 %v612, %v613
  %v615 = vlog2.pop %v614
  %v616 = vmul.f32 %v615, 0.6931472
  %v617 = vsub.f32 %v606, %v616
  %v618 = vmul.f32 %v617, 1.442695
  %v619 = vpow.pop %v618
  %620 = vrot.lane.b32.xlu0 %v619, 4
  %v621 = vpop.permute.xlu0 %620
  %622 = vrot.lane.b32.xlu0 %v619, 124
  %v623 = vpop.permute.xlu0 %622
  %v624 = vsel %vm253, %v621, %v623
  %v625 = vadd.f32 %v619, %v624
  %626 = vrot.lane.b32.xlu0 %v625, 2
  %v627 = vpop.permute.xlu0 %626
  %628 = vrot.lane.b32.xlu0 %v625, 126
  %v629 = vpop.permute.xlu0 %628
  %v630 = vsel %vm272, %v627, %v629
  %v631 = vadd.f32 %v625, %v630
  %632 = vrot.lane.b32.xlu0 %v631, 1
  %v633 = vpop.permute.xlu0 %632
  %634 = vrot.lane.b32.xlu0 %v631, 127
  %v635 = vpop.permute.xlu0 %634
  %v636 = vsel %vm291, %v633, %v635
  %v637 = vadd.f32 %v631, %v636
  %v638 = vlog2.pop %v637
  %v639 = vmul.f32 %v638, 0.6931472
  %v640 = vsub.f32 %v617, %v639
  %v641 = vmul.f32 %v640, 1.442695
  %v642 = vpow.pop %v641
  %v643 = vrot.slane %v642, 4
  %v644 = vadd.f32 %v642, %v643
  %v645 = vrot.slane %v644, 2
  %v646 = vadd.f32 %v644, %v645
  %v647 = vrot.slane %v646, 1
  %v648 = vadd.f32 %v646, %v647
  %v649 = vlog2.pop %v648
  %v650 = vmul.f32 %v649, 0.6931472
  %v651 = vsub.f32 %v640, %v650
  %v652 = vmul.f32 %v651, 1.442695
  %v653 = vpow.pop %v652
  %654 = vrot.lane.b32.xlu0 %v653, 4
  %v655 = vpop.permute.xlu0 %654
  %656 = vrot.lane.b32.xlu0 %v653, 124
  %v657 = vpop.permute.xlu0 %656
  %v658 = vsel %vm253, %v655, %v657
  %v659 = vadd.f32 %v653, %v658
  %660 = vrot.lane.b32.xlu0 %v659, 2
  %v661 = vpop.permute.xlu0 %660
  %662 = vrot.lane.b32.xlu0 %v659, 126
  %v663 = vpop.permute.xlu0 %662
  %v664 = vsel %vm272, %v661, %v663
  %v665 = vadd.f32 %v659, %v664
  %666 = vrot.lane.b32.xlu0 %v665, 1
  %v667 = vpop.permute.xlu0 %666
  %668 = vrot.lane.b32.xlu0 %v665, 127
  %v669 = vpop.permute.xlu0 %668
  %v670 = vsel %vm291, %v667, %v669
  %v671 = vadd.f32 %v665, %v670
  %v672 = vlog2.pop %v671
  %v673 = vmul.f32 %v672, 0.6931472
  %v674 = vsub.f32 %v651, %v673
  %v675 = vmul.f32 %v674, 1.442695
  %v676 = vpow.pop %v675
  %v677 = vrot.slane %v676, 4
  %v678 = vadd.f32 %v676, %v677
  %v679 = vrot.slane %v678, 2
  %v680 = vadd.f32 %v678, %v679
  %v681 = vrot.slane %v680, 1
  %v682 = vadd.f32 %v680, %v681
  %v683 = vlog2.pop %v682
  %v684 = vmul.f32 %v683, 0.6931472
  %v685 = vsub.f32 %v674, %v684
  %v686 = vmul.f32 %v685, 1.442695
  %v687 = vpow.pop %v686
  %688 = vrot.lane.b32.xlu0 %v687, 4
  %v689 = vpop.permute.xlu0 %688
  %690 = vrot.lane.b32.xlu0 %v687, 124
  %v691 = vpop.permute.xlu0 %690
  %v692 = vsel %vm253, %v689, %v691
  %v693 = vadd.f32 %v687, %v692
  %694 = vrot.lane.b32.xlu0 %v693, 2
  %v695 = vpop.permute.xlu0 %694
  %696 = vrot.lane.b32.xlu0 %v693, 126
  %v697 = vpop.permute.xlu0 %696
  %v698 = vsel %vm272, %v695, %v697
  %v699 = vadd.f32 %v693, %v698
  %700 = vrot.lane.b32.xlu0 %v699, 1
  %v701 = vpop.permute.xlu0 %700
  %702 = vrot.lane.b32.xlu0 %v699, 127
  %v703 = vpop.permute.xlu0 %702
  %v704 = vsel %vm291, %v701, %v703
  %v705 = vadd.f32 %v699, %v704
  %v706 = vlog2.pop %v705
  %v707 = vmul.f32 %v706, 0.6931472
  %v708 = vsub.f32 %v685, %v707
  %v709 = vmul.f32 %v708, 1.442695
  %v710 = vpow.pop %v709
  %v711 = vrot.slane %v710, 4
  %v712 = vadd.f32 %v710, %v711
  %v713 = vrot.slane %v712, 2
  %v714 = vadd.f32 %v712, %v713
  %v715 = vrot.slane %v714, 1
  %v716 = vadd.f32 %v714, %v715
  %v717 = vlog2.pop %v716
  %v718 = vmul.f32 %v717, 0.6931472
  %v719 = vsub.f32 %v708, %v718
  %v720 = vmul.f32 %v719, 1.442695
  %v721 = vpow.pop %v720
  %722 = vrot.lane.b32.xlu0 %v721, 4
  %v723 = vpop.permute.xlu0 %722
  %724 = vrot.lane.b32.xlu0 %v721, 124
  %v725 = vpop.permute.xlu0 %724
  %v726 = vsel %vm253, %v723, %v725
  %v727 = vadd.f32 %v721, %v726
  %728 = vrot.lane.b32.xlu0 %v727, 2
  %v729 = vpop.permute.xlu0 %728
  %730 = vrot.lane.b32.xlu0 %v727, 126
  %v731 = vpop.permute.xlu0 %730
  %v732 = vsel %vm272, %v729, %v731
  %v733 = vadd.f32 %v727, %v732
  %734 = vrot.lane.b32.xlu0 %v733, 1
  %v735 = vpop.permute.xlu0 %734
  %736 = vrot.lane.b32.xlu0 %v733, 127
  %v737 = vpop.permute.xlu0 %736
  %v738 = vsel %vm291, %v735, %v737
  %v739 = vadd.f32 %v733, %v738
  %v740 = vlog2.pop %v739
  %v741 = vmul.f32 %v740, 0.6931472
  %v742 = vsub.f32 %v719, %v741
  %v743 = vmul.f32 %v742, 1.442695
  %v744 = vpow.pop %v743
  %v745 = vrot.slane %v744, 4
  %v746 = vadd.f32 %v744, %v745
  %v747 = vrot.slane %v746, 2
  %v748 = vadd.f32 %v746, %v747
  %v749 = vrot.slane %v748, 1
  %v750 = vadd.f32 %v748, %v749
  %v751 = vlog2.pop %v750
  %v752 = vmul.f32 %v751, 0.6931472
  %v753 = vsub.f32 %v742, %v752
  %v754 = vmul.f32 %v753, 1.442695
  %v755 = vpow.pop %v754
  %756 = vrot.lane.b32.xlu0 %v755, 4
  %v757 = vpop.permute.xlu0 %756
  %758 = vrot.lane.b32.xlu0 %v755, 124
  %v759 = vpop.permute.xlu0 %758
  %v760 = vsel %vm253, %v757, %v759
  %v761 = vadd.f32 %v755, %v760
  %762 = vrot.lane.b32.xlu0 %v761, 2
  %v763 = vpop.permute.xlu0 %762
  %764 = vrot.lane.b32.xlu0 %v761, 126
  %v765 = vpop.permute.xlu0 %764
  %v766 = vsel %vm272, %v763, %v765
  %v767 = vadd.f32 %v761, %v766
  %768 = vrot.lane.b32.xlu0 %v767, 1
  %v769 = vpop.permute.xlu0 %768
  %770 = vrot.lane.b32.xlu0 %v767, 127
  %v771 = vpop.permute.xlu0 %770
  %v772 = vsel %vm291, %v769, %v771
  %v773 = vadd.f32 %v767, %v772
  %v774 = vlog2.pop %v773
  %v775 = vmul.f32 %v774, 0.6931472
  %v776 = vsub.f32 %v753, %v775
  %v777 = vmul.f32 %v776, 1.442695
  %v778 = vpow.pop %v777
  %v779 = vrot.slane %v778, 4
  %v780 = vadd.f32 %v778, %v779
  %v781 = vrot.slane %v780, 2
  %v782 = vadd.f32 %v780, %v781
  %v783 = vrot.slane %v782, 1
  %v784 = vadd.f32 %v782, %v783
  %v785 = vlog2.pop %v784
  %v786 = vmul.f32 %v785, 0.6931472
  %v787 = vsub.f32 %v776, %v786
  %v788 = vmul.f32 %v787, 1.442695
  %v789 = vpow.pop %v788
  %790 = vrot.lane.b32.xlu0 %v789, 4
  %v791 = vpop.permute.xlu0 %790
  %792 = vrot.lane.b32.xlu0 %v789, 124
  %v793 = vpop.permute.xlu0 %792
  %v794 = vsel %vm253, %v791, %v793
  %v795 = vadd.f32 %v789, %v794
  %796 = vrot.lane.b32.xlu0 %v795, 2
  %v797 = vpop.permute.xlu0 %796
  %798 = vrot.lane.b32.xlu0 %v795, 126
  %v799 = vpop.permute.xlu0 %798
  %v800 = vsel %vm272, %v797, %v799
  %v801 = vadd.f32 %v795, %v800
  %802 = vrot.lane.b32.xlu0 %v801, 1
  %v803 = vpop.permute.xlu0 %802
  %804 = vrot.lane.b32.xlu0 %v801, 127
  %v805 = vpop.permute.xlu0 %804
  %v806 = vsel %vm291, %v803, %v805
  %v807 = vadd.f32 %v801, %v806
  %v808 = vlog2.pop %v807
  %v809 = vmul.f32 %v808, 0.6931472
  %v810 = vsub.f32 %v787, %v809
  %v811 = vmul.f32 %v810, 1.442695
  %v812 = vpow.pop %v811
  %v813 = vrot.slane %v812, 4
  %v814 = vadd.f32 %v812, %v813
  %v815 = vrot.slane %v814, 2
  %v816 = vadd.f32 %v814, %v815
  %v817 = vrot.slane %v816, 1
  %v818 = vadd.f32 %v816, %v817
  %v819 = vlog2.pop %v818
  %v820 = vmul.f32 %v819, 0.6931472
  %v821 = vsub.f32 %v810, %v820
  %v822 = vmul.f32 %v821, 1.442695
  %v823 = vpow.pop %v822
  %824 = vrot.lane.b32.xlu0 %v823, 4
  %v825 = vpop.permute.xlu0 %824
  %826 = vrot.lane.b32.xlu0 %v823, 124
  %v827 = vpop.permute.xlu0 %826
  %v828 = vsel %vm253, %v825, %v827
  %v829 = vadd.f32 %v823, %v828
  %830 = vrot.lane.b32.xlu0 %v829, 2
  %v831 = vpop.permute.xlu0 %830
  %832 = vrot.lane.b32.xlu0 %v829, 126
  %v833 = vpop.permute.xlu0 %832
  %v834 = vsel %vm272, %v831, %v833
  %v835 = vadd.f32 %v829, %v834
  %836 = vrot.lane.b32.xlu0 %v835, 1
  %v837 = vpop.permute.xlu0 %836
  %838 = vrot.lane.b32.xlu0 %v835, 127
  %v839 = vpop.permute.xlu0 %838
  %v840 = vsel %vm291, %v837, %v839
  %v841 = vadd.f32 %v835, %v840
  %v842 = vlog2.pop %v841
  %v843 = vmul.f32 %v842, 0.6931472
  %v844 = vsub.f32 %v821, %v843
  %v845 = vmul.f32 %v844, 1.442695
  %v846 = vpow.pop %v845
  %v847 = vrot.slane %v846, 4
  %v848 = vadd.f32 %v846, %v847
  %v849 = vrot.slane %v848, 2
  %v850 = vadd.f32 %v848, %v849
  %v851 = vrot.slane %v850, 1
  %v852 = vadd.f32 %v850, %v851
  %v853 = vlog2.pop %v852
  %v854 = vmul.f32 %v853, 0.6931472
  %v855 = vsub.f32 %v844, %v854
  %v856 = vmul.f32 %v855, 1.442695
  %v857 = vpow.pop %v856
  %858 = vrot.lane.b32.xlu0 %v857, 4
  %v859 = vpop.permute.xlu0 %858
  %860 = vrot.lane.b32.xlu0 %v857, 124
  %v861 = vpop.permute.xlu0 %860
  %v862 = vsel %vm253, %v859, %v861
  %v863 = vadd.f32 %v857, %v862
  %864 = vrot.lane.b32.xlu0 %v863, 2
  %v865 = vpop.permute.xlu0 %864
  %866 = vrot.lane.b32.xlu0 %v863, 126
  %v867 = vpop.permute.xlu0 %866
  %v868 = vsel %vm272, %v865, %v867
  %v869 = vadd.f32 %v863, %v868
  %870 = vrot.lane.b32.xlu0 %v869, 1
  %v871 = vpop.permute.xlu0 %870
  %872 = vrot.lane.b32.xlu0 %v869, 127
  %v873 = vpop.permute.xlu0 %872
  %v874 = vsel %vm291, %v871, %v873
  %v875 = vadd.f32 %v869, %v874
  %v876 = vlog2.pop %v875
  %v877 = vmul.f32 %v876, 0.6931472
  %v878 = vsub.f32 %v855, %v877
  %v879 = vmul.f32 %v878, 1.442695
  %v880 = vpow.pop %v879
  %v881 = vrot.slane %v880, 4
  %v882 = vadd.f32 %v880, %v881
  %v883 = vrot.slane %v882, 2
  %v884 = vadd.f32 %v882, %v883
  %v885 = vrot.slane %v884, 1
  %v886 = vadd.f32 %v884, %v885
  %v887 = vlog2.pop %v886
  %v888 = vmul.f32 %v887, 0.6931472
  %v889 = vsub.f32 %v878, %v888
  %v890 = vmul.f32 %v889, 1.442695
  %v891 = vpow.pop %v890
  %892 = vrot.lane.b32.xlu0 %v891, 4
  %v893 = vpop.permute.xlu0 %892
  %894 = vrot.lane.b32.xlu0 %v891, 124
  %v895 = vpop.permute.xlu0 %894
  %v896 = vsel %vm253, %v893, %v895
  %v897 = vadd.f32 %v891, %v896
  %898 = vrot.lane.b32.xlu0 %v897, 2
  %v899 = vpop.permute.xlu0 %898
  %900 = vrot.lane.b32.xlu0 %v897, 126
  %v901 = vpop.permute.xlu0 %900
  %v902 = vsel %vm272, %v899, %v901
  %v903 = vadd.f32 %v897, %v902
  %904 = vrot.lane.b32.xlu0 %v903, 1
  %v905 = vpop.permute.xlu0 %904
  %906 = vrot.lane.b32.xlu0 %v903, 127
  %v907 = vpop.permute.xlu0 %906
  %v908 = vsel %vm291, %v905, %v907
  %v909 = vadd.f32 %v903, %v908
  %v910 = vlog2.pop %v909
  %v911 = vmul.f32 %v910, 0.6931472
  %v912 = vsub.f32 %v889, %v911
  %v913 = vmul.f32 %v912, 1.442695
  %v914 = vpow.pop %v913
  %v915 = vrot.slane %v914, 4
  %v916 = vadd.f32 %v914, %v915
  %v917 = vrot.slane %v916, 2
  %v918 = vadd.f32 %v916, %v917
  %v919 = vrot.slane %v918, 1
  %v920 = vadd.f32 %v918, %v919
  %v921 = vlog2.pop %v920
  %v922 = vmul.f32 %v921, 0.6931472
  %v923 = vsub.f32 %v912, %v922
  %v924 = vmul.f32 %v923, 1.442695
  %v925 = vpow.pop %v924
  %926 = vrot.lane.b32.xlu0 %v925, 4
  %v927 = vpop.permute.xlu0 %926
  %928 = vrot.lane.b32.xlu0 %v925, 124
  %v929 = vpop.permute.xlu0 %928
  %v930 = vsel %vm253, %v927, %v929
  %v931 = vadd.f32 %v925, %v930
  %932 = vrot.lane.b32.xlu0 %v931, 2
  %v933 = vpop.permute.xlu0 %932
  %934 = vrot.lane.b32.xlu0 %v931, 126
  %v935 = vpop.permute.xlu0 %934
  %v936 = vsel %vm272, %v933, %v935
  %v937 = vadd.f32 %v931, %v936
  %938 = vrot.lane.b32.xlu0 %v937, 1
  %v939 = vpop.permute.xlu0 %938
  %940 = vrot.lane.b32.xlu0 %v937, 127
  %v941 = vpop.permute.xlu0 %940
  %v942 = vsel %vm291, %v939, %v941
  %v943 = vadd.f32 %v937, %v942
  %v944 = vlog2.pop %v943
  %v945 = vmul.f32 %v944, 0.6931472
  %v946 = vsub.f32 %v923, %v945
  %v947 = vmul.f32 %v946, 1.442695
  %v948 = vpow.pop %v947
  %v949 = vrot.slane %v948, 4
  %v950 = vadd.f32 %v948, %v949
  %v951 = vrot.slane %v950, 2
  %v952 = vadd.f32 %v950, %v951
  %v953 = vrot.slane %v952, 1
  %v954 = vadd.f32 %v952, %v953
  %v955 = vlog2.pop %v954
  %v956 = vmul.f32 %v955, 0.6931472
  %v957 = vsub.f32 %v946, %v956
  %v958 = vmul.f32 %v957, 1.442695
  %v959 = vpow.pop %v958
  %960 = vrot.lane.b32.xlu0 %v959, 4
  %v961 = vpop.permute.xlu0 %960
  %962 = vrot.lane.b32.xlu0 %v959, 124
  %v963 = vpop.permute.xlu0 %962
  %v964 = vsel %vm253, %v961, %v963
  %v965 = vadd.f32 %v959, %v964
  %966 = vrot.lane.b32.xlu0 %v965, 2
  %v967 = vpop.permute.xlu0 %966
  %968 = vrot.lane.b32.xlu0 %v965, 126
  %v969 = vpop.permute.xlu0 %968
  %v970 = vsel %vm272, %v967, %v969
  %v971 = vadd.f32 %v965, %v970
  %972 = vrot.lane.b32.xlu0 %v971, 1
  %v973 = vpop.permute.xlu0 %972
  %974 = vrot.lane.b32.xlu0 %v971, 127
  %v975 = vpop.permute.xlu0 %974
  %v976 = vsel %vm291, %v973, %v975
  %v977 = vadd.f32 %v971, %v976
  %v978 = vlog2.pop %v977
  %v979 = vmul.f32 %v978, 0.6931472
  %v980 = vsub.f32 %v957, %v979
  %v981 = vmul.f32 %v980, 1.442695
  %v982 = vpow.pop %v981
  %v983 = vrot.slane %v982, 4
  %v984 = vadd.f32 %v982, %v983
  %v985 = vrot.slane %v984, 2
  %v986 = vadd.f32 %v984, %v985
  %v987 = vrot.slane %v986, 1
  %v988 = vadd.f32 %v986, %v987
  %v989 = vlog2.pop %v988
  %v990 = vmul.f32 %v989, 0.6931472
  %v991 = vsub.f32 %v980, %v990
  %v992 = vmul.f32 %v991, 1.442695
  %v993 = vpow.pop %v992
  %994 = vst [vmem:[%s6] sm:$0xff] %v993
  // Predicated region
  $region22: #{sinkhorn_net_forward.1} parent=0 // pred_check
    _
  $region23: #{sinkhorn_net_forward.1} parent=0 // pred_check_branch
    %996 = sbr.rel (0) target = $region25
  $region24: #{sinkhorn_net_forward.1} parent=0 // pred_region
    _
  $region25: #{sinkhorn_net_forward.1} parent=0 // pred_fallthru
    _
  // Predicated region
  $region26: #{sinkhorn_net_forward.1} parent=0 // pred_check
    _
  $region27: #{sinkhorn_net_forward.1} parent=0 // pred_check_branch
    %998 = sbr.rel (0) target = $region29
  $region28: #{sinkhorn_net_forward.1} parent=0 // pred_region
    _
  $region29: #{sinkhorn_net_forward.1} parent=0 // pred_fallthru
    _
  // Predicated region
  $region30: #{sinkhorn_net_forward.1} parent=0 // pred_check
    _
  $region31: #{sinkhorn_net_forward.1} parent=0 // pred_check_branch
    %1000 = sbr.rel (0) target = $region33
  $region32: #{sinkhorn_net_forward.1} parent=0 // pred_region
    _
  $region33: #{sinkhorn_net_forward.1} parent=0 // pred_fallthru
    _
  // Predicated region
  $region34: #{sinkhorn_net_forward.1} parent=0 // pred_check
    _
  $region35: #{sinkhorn_net_forward.1} parent=0 // pred_check_branch
    %1002 = sbr.rel (0) target = $region37
  $region36: #{sinkhorn_net_forward.1} parent=0 // pred_region
    _
  $region37: #{sinkhorn_net_forward.1} parent=0 // pred_fallthru
    _

</llo_original>
